<compile_context>
chip_gen: v7x
topology: tpu7x:2x2x1
jax: 0.10.0
libtpu: 0.0.40
codegen_flags: <defaults>
</compile_context>

<pallas_src>
import functools
import math

import numpy as np
import jax
import jax.numpy as jnp
from jax import lax
from jax.experimental import pallas as pl
from jax.experimental.pallas import tpu as pltpu


# ----------------------------------------------------------------------------
# Fused kernel: one (batch, head) grid step.
#   x (S,E) bf16, Wq_h^T (E,Dh) bf16, bq_h (1,Dh) f32, Wk_h^T, bk_h,
#   merged (E,S) bf16, Wo^T (E,E) bf16, bo (1,E) f32
#   -> out (S,E) f32, keep (S,1) i32
# ----------------------------------------------------------------------------
def fused_attention_kernel(x_ref, wq_t_ref, bq_ref, wk_t_ref, bk_ref,
                           merged_ref, wo_t_ref, bo_ref,
                           out_ref, keep_ref, *, scale, threshold):
    x = x_ref[...]                                                     # (S, E) bf16
    # Per-head projections: full K=E contraction against head-major slabs.
    q = jnp.dot(x, wq_t_ref[...], preferred_element_type=jnp.float32) + bq_ref[...]
    k = jnp.dot(x, wk_t_ref[...], preferred_element_type=jnp.float32) + bk_ref[...]
    # sim = (q @ k^T) * scale — contract on Dh, no explicit transpose.
    sim = lax.dot_general(q.astype(jnp.bfloat16), k.astype(jnp.bfloat16),
                          (((1,), (1,)), ((), ())),
                          preferred_element_type=jnp.float32) * scale  # (S, S) f32
    # Row max doubles as the merge mask: any_j(sim[i,j] > thr) == max_j > thr.
    m = jnp.max(sim, axis=-1, keepdims=True)                           # (S, 1)
    keep_ref[...] = (m > threshold).astype(jnp.int32)
    # Stable softmax; divide goes to the EUP via approximate reciprocal.
    p = jnp.exp(sim - m)
    denom = jnp.sum(p, axis=-1, keepdims=True)
    attn = p * pl.reciprocal(denom, approx=True)                       # (S, S) f32
    # merged_output = attn @ merged_tokens ; output = merged_output @ Wo^T + bo
    mo = jnp.dot(attn.astype(jnp.bfloat16), merged_ref[...],
                 preferred_element_type=jnp.float32)                   # (S, M=E)
    out_ref[...] = (jnp.dot(mo.astype(jnp.bfloat16), wo_t_ref[...],
                            preferred_element_type=jnp.float32) + bo_ref[...])


# ----------------------------------------------------------------------------
# One-time parameter prep (outside the hot path): head-major weight slabs,
# pre-transposed, cast to bf16 for single-pass MXU matmuls.
# ----------------------------------------------------------------------------
def prepare_params(params, num_heads):
    wq, bq, wk, bk, wv, bv, wo, bo = params   # wv/bv unused: attn@v is dead code in ref
    E = wq.shape[0]
    Dh = E // num_heads
    wq_t = jnp.transpose(wq.reshape(num_heads, Dh, E), (0, 2, 1)).astype(jnp.bfloat16)
    wk_t = jnp.transpose(wk.reshape(num_heads, Dh, E), (0, 2, 1)).astype(jnp.bfloat16)
    bq_h = bq.reshape(num_heads, 1, Dh).astype(jnp.float32)
    bk_h = bk.reshape(num_heads, 1, Dh).astype(jnp.float32)
    wo_t = wo.T.astype(jnp.bfloat16)
    bo_r = bo.reshape(1, E).astype(jnp.float32)
    return wq_t, bq_h, wk_t, bk_h, wo_t, bo_r


def token_merging_attention(x, prepped, num_heads, threshold):
    wq_t, bq_h, wk_t, bk_h, wo_t, bo_r = prepped
    B, S, E = x.shape
    H = num_heads
    Dh = E // num_heads
    # Module's implicit constraint (out_proj / attn@merged only type-check then).
    assert S == E, "TokenMergingAttention requires seq_len == embed_dim"
    scale = 1.0 / math.sqrt(Dh)

    # Every token merges under the module's constraint, so merged_tokens is
    # mean(x, axis=0).T — computed on device, no host sync.  The kernel's keep
    # output lets the caller verify the constraint.
    # TODO(synk): dynamic-shape token selection (variable merged count) has no
    # static-shape Pallas equivalent; semantics beyond the all-merge case are
    # not representable.
    merged = jnp.mean(x, axis=0).T.astype(jnp.bfloat16)                 # (E, M=S)
    x_bf = x.astype(jnp.bfloat16)

    kernel = functools.partial(fused_attention_kernel, scale=scale, threshold=threshold)
    out, keep = pl.pallas_call(
        kernel,
        out_shape=(jax.ShapeDtypeStruct((B, H, S, E), jnp.float32),
                   jax.ShapeDtypeStruct((B, H, S, 1), jnp.int32)),
        grid=(B, H),
        in_specs=[
            pl.BlockSpec((None, S, E), lambda b, h: (b, 0, 0)),          # x
            pl.BlockSpec((None, E, Dh), lambda b, h: (h, 0, 0)),         # Wq_h^T
            pl.BlockSpec((None, 1, Dh), lambda b, h: (h, 0, 0)),         # bq_h
            pl.BlockSpec((None, E, Dh), lambda b, h: (h, 0, 0)),         # Wk_h^T
            pl.BlockSpec((None, 1, Dh), lambda b, h: (h, 0, 0)),         # bk_h
            pl.BlockSpec((E, S), lambda b, h: (0, 0)),                   # merged tokens
            pl.BlockSpec((E, E), lambda b, h: (0, 0)),                   # Wo^T
            pl.BlockSpec((1, E), lambda b, h: (0, 0)),                   # bo
        ],
        out_specs=(
            pl.BlockSpec((None, None, S, E), lambda b, h: (b, h, 0, 0)),
            pl.BlockSpec((None, None, S, 1), lambda b, h: (b, h, 0, 0)),
        ),
        compiler_params=pltpu.CompilerParams(
            dimension_semantics=("parallel", "parallel")),
    )(x_bf, wq_t, bq_h, wk_t, bk_h, merged, wo_t, bo_r)

    all_merged = jnp.all(keep > 0)
    return out, all_merged


# ----------------------------------------------------------------------------
# Plain-JAX reference (mirrors the PyTorch forward) for validation.
# ----------------------------------------------------------------------------
def reference_forward(x, params, num_heads, threshold):
    wq, bq, wk, bk, wv, bv, wo, bo = params
    B, S, E = x.shape
    Dh = E // num_heads
    hp = lax.Precision.HIGHEST
    q = (jnp.einsum("bse,oe->bso", x, wq, precision=hp) + bq
         ).reshape(B, S, num_heads, Dh).transpose(0, 2, 1, 3)
    k = (jnp.einsum("bse,oe->bso", x, wk, precision=hp) + bk
         ).reshape(B, S, num_heads, Dh).transpose(0, 2, 1, 3)
    sim = jnp.einsum("bhsd,bhtd->bhst", q, k, precision=hp) / jnp.sqrt(jnp.float32(Dh))
    # merge_tokens: dynamic gather on host mirrors the PyTorch loop.
    mask = np.asarray(sim) > threshold                   # (B, H, S, S)
    keep = mask.any(axis=(0, 1, 3))                      # (S,)
    x_mean = np.asarray(jnp.mean(x, axis=0))             # (S, E)
    merged = jnp.asarray(x_mean[keep].T)                 # (E, M)
    attn = jax.nn.softmax(sim, axis=-1)
    merged_out = jnp.einsum("bhst,tm->bhsm", attn, merged, precision=hp)
    out = jnp.einsum("bhsm,om->bhso", merged_out, wo, precision=hp) + bo
    return out


if __name__ == "__main__":
    # Small shapes consistent with the module's implicit constraints
    # (seq_len == embed_dim; threshold low enough that every token merges).
    B, S, E, H = 2, 128, 128, 4
    threshold = -1.0e4

    key = jax.random.PRNGKey(0)
    ks = jax.random.split(key, 9)
    bound = 1.0 / math.sqrt(E)
    init_w = lambda k: jax.random.uniform(k, (E, E), jnp.float32, -bound, bound)
    init_b = lambda k: jax.random.uniform(k, (E,), jnp.float32, -bound, bound)
    params = (init_w(ks[0]), init_b(ks[1]),   # q_proj
              init_w(ks[2]), init_b(ks[3]),   # k_proj
              init_w(ks[4]), init_b(ks[5]),   # v_proj (dead code in the reference forward)
              init_w(ks[6]), init_b(ks[7]))   # out_proj
    x = jax.random.normal(ks[8], (B, S, E), jnp.float32)

    prepped = prepare_params(params, H)
    fwd = jax.jit(functools.partial(token_merging_attention,
                                    num_heads=H, threshold=threshold))
    out, all_merged = fwd(x, prepped)
    out = jax.block_until_ready(out)

    assert out.shape == (B, H, S, E)
    assert bool(all_merged), "module's implicit constraint: every token must merge"

    ref = reference_forward(x, params, H, threshold)
    # bf16 MXU inputs (f32 accumulation) vs f32-HIGHEST reference -> ~1e-3 abs error.
    np.testing.assert_allclose(np.asarray(out), np.asarray(ref), rtol=2e-2, atol=2e-2)

    print("KERNEL_OK")
</pallas_src>

<mosaic_0001>
module attributes {stable_mosaic.version = 11 : i64} {
  func.func @fused_attention_kernel(%arg0: i32, %arg1: i32, %arg2: memref<1x128x128xbf16, #tpu.memory_space<vmem>>, %arg3: memref<1x128x32xbf16, #tpu.memory_space<vmem>>, %arg4: memref<1x1x32xf32, #tpu.memory_space<vmem>>, %arg5: memref<1x128x32xbf16, #tpu.memory_space<vmem>>, %arg6: memref<1x1x32xf32, #tpu.memory_space<vmem>>, %arg7: memref<128x128xbf16, #tpu.memory_space<vmem>>, %arg8: memref<128x128xbf16, #tpu.memory_space<vmem>>, %arg9: memref<1x128xf32, #tpu.memory_space<vmem>>, %arg10: memref<1x1x128x128xf32, #tpu.memory_space<vmem>>, %arg11: memref<1x1x128x1xi32, #tpu.memory_space<vmem>>) attributes {dimension_semantics = [#tpu.dimension_semantics<parallel>, #tpu.dimension_semantics<parallel>], iteration_bounds = array<i64: 2, 4>, scalar_prefetch = 0 : i64, scratch_operands = 0 : i64, tpu.core_type = #tpu.core_type<tc>, window_params = [{transform_indices = @transform_0, window_bounds = array<i64: 1, 128, 128>}, {transform_indices = @transform_1, window_bounds = array<i64: 1, 128, 32>}, {transform_indices = @transform_2, window_bounds = array<i64: 1, 1, 32>}, {transform_indices = @transform_3, window_bounds = array<i64: 1, 128, 32>}, {transform_indices = @transform_4, window_bounds = array<i64: 1, 1, 32>}, {pipeline_mode = #tpu.pipeline_mode<synchronous>, transform_indices = @transform_5, window_bounds = array<i64: 128, 128>}, {pipeline_mode = #tpu.pipeline_mode<synchronous>, transform_indices = @transform_6, window_bounds = array<i64: 128, 128>}, {pipeline_mode = #tpu.pipeline_mode<synchronous>, transform_indices = @transform_7, window_bounds = array<i64: 1, 128>}, {transform_indices = @transform_8, window_bounds = array<i64: 1, 1, 128, 128>}, {transform_indices = @transform_9, window_bounds = array<i64: 1, 1, 128, 1>}]} {
    %c0 = arith.constant 0 : index
    %c0_0 = arith.constant 0 : index
    %c0_1 = arith.constant 0 : index
    %0 = vector.load %arg2[%c0, %c0_0, %c0_1] : memref<1x128x128xbf16, #tpu.memory_space<vmem>>, vector<1x128x128xbf16>
    %1 = vector.shape_cast %0 : vector<1x128x128xbf16> to vector<128x128xbf16>
    %c0_2 = arith.constant 0 : index
    %c0_3 = arith.constant 0 : index
    %c0_4 = arith.constant 0 : index
    %2 = vector.load %arg3[%c0_2, %c0_3, %c0_4] : memref<1x128x32xbf16, #tpu.memory_space<vmem>>, vector<1x128x32xbf16>
    %3 = vector.shape_cast %2 : vector<1x128x32xbf16> to vector<128x32xbf16>
    %cst = arith.constant dense<0.000000e+00> : vector<128x32xf32>
    %4 = tpu.matmul %1, %3, %cst {dimension_numbers = #tpu.dot_dimension_numbers<[1], [0], [0], [1], [0, 0, 1, 1], [], []>} : vector<128x128xbf16>, vector<128x32xbf16>, vector<128x32xf32> -> vector<128x32xf32>
    %c0_5 = arith.constant 0 : index
    %c0_6 = arith.constant 0 : index
    %c0_7 = arith.constant 0 : index
    %5 = vector.load %arg4[%c0_5, %c0_6, %c0_7] : memref<1x1x32xf32, #tpu.memory_space<vmem>>, vector<1x1x32xf32>
    %6 = vector.shape_cast %5 : vector<1x1x32xf32> to vector<1x32xf32>
    %7 = vector.broadcast %6 : vector<1x32xf32> to vector<128x32xf32>
    %8 = arith.addf %4, %7 : vector<128x32xf32>
    %c0_8 = arith.constant 0 : index
    %c0_9 = arith.constant 0 : index
    %c0_10 = arith.constant 0 : index
    %9 = vector.load %arg5[%c0_8, %c0_9, %c0_10] : memref<1x128x32xbf16, #tpu.memory_space<vmem>>, vector<1x128x32xbf16>
    %10 = vector.shape_cast %9 : vector<1x128x32xbf16> to vector<128x32xbf16>
    %cst_11 = arith.constant dense<0.000000e+00> : vector<128x32xf32>
    %11 = tpu.matmul %1, %10, %cst_11 {dimension_numbers = #tpu.dot_dimension_numbers<[1], [0], [0], [1], [0, 0, 1, 1], [], []>} : vector<128x128xbf16>, vector<128x32xbf16>, vector<128x32xf32> -> vector<128x32xf32>
    %c0_12 = arith.constant 0 : index
    %c0_13 = arith.constant 0 : index
    %c0_14 = arith.constant 0 : index
    %12 = vector.load %arg6[%c0_12, %c0_13, %c0_14] : memref<1x1x32xf32, #tpu.memory_space<vmem>>, vector<1x1x32xf32>
    %13 = vector.shape_cast %12 : vector<1x1x32xf32> to vector<1x32xf32>
    %14 = vector.broadcast %13 : vector<1x32xf32> to vector<128x32xf32>
    %15 = arith.addf %11, %14 : vector<128x32xf32>
    %16 = arith.truncf %8 : vector<128x32xf32> to vector<128x32xbf16>
    %17 = arith.truncf %15 : vector<128x32xf32> to vector<128x32xbf16>
    %cst_15 = arith.constant dense<0.000000e+00> : vector<128x128xf32>
    %18 = tpu.matmul %16, %17, %cst_15 {dimension_numbers = #tpu.dot_dimension_numbers<[1], [1], [0], [0], [0, 0, 1, 0], [], []>} : vector<128x32xbf16>, vector<128x32xbf16>, vector<128x128xf32> -> vector<128x128xf32>
    %cst_16 = arith.constant 0.176776692 : f32
    %19 = vector.broadcast %cst_16 : f32 to vector<128x128xf32>
    %20 = arith.mulf %18, %19 : vector<128x128xf32>
    %cst_17 = arith.constant dense<0xFF800000> : vector<128xf32>
    %21 = vector.multi_reduction <maximumf>, %20, %cst_17 [1] : vector<128x128xf32> to vector<128xf32>
    %22 = vector.shape_cast %21 : vector<128xf32> to vector<128x1xf32>
    %cst_18 = arith.constant -1.000000e+04 : f32
    %23 = vector.broadcast %cst_18 : f32 to vector<128x1xf32>
    %24 = arith.cmpf ogt, %22, %23 : vector<128x1xf32>
    %25 = arith.extui %24 : vector<128x1xi1> to vector<128x1xi32>
    %c0_19 = arith.constant 0 : index
    %c0_20 = arith.constant 0 : index
    %c0_21 = arith.constant 0 : index
    %c0_22 = arith.constant 0 : index
    %26 = vector.load %arg11[%c0_19, %c0_20, %c0_21, %c0_22] : memref<1x1x128x1xi32, #tpu.memory_space<vmem>>, vector<1x1x128x1xi32>
    %27 = vector.shape_cast %26 : vector<1x1x128x1xi32> to vector<128x1xi32>
    %28 = vector.shape_cast %25 : vector<128x1xi32> to vector<1x1x128x1xi32>
    tpu.vector_store %arg11[%c0_19, %c0_20, %c0_21, %c0_22], %28 {strides = array<i32>} : memref<1x1x128x1xi32, #tpu.memory_space<vmem>>, vector<1x1x128x1xi32>,
    %29 = vector.broadcast %22 : vector<128x1xf32> to vector<128x128xf32>
    %30 = arith.subf %20, %29 : vector<128x128xf32>
    %31 = math.exp %30 : vector<128x128xf32>
    %cst_23 = arith.constant dense<0.000000e+00> : vector<128xf32>
    %32 = vector.multi_reduction <add>, %31, %cst_23 [1] : vector<128x128xf32> to vector<128xf32>
    %33 = vector.shape_cast %32 : vector<128xf32> to vector<128x1xf32>
    %34 = tpu.reciprocal %33 {approx = true} : vector<128x1xf32> -> vector<128x1xf32>
    %35 = vector.broadcast %34 : vector<128x1xf32> to vector<128x128xf32>
    %36 = arith.mulf %31, %35 : vector<128x128xf32>
    %37 = arith.truncf %36 : vector<128x128xf32> to vector<128x128xbf16>
    %c0_24 = arith.constant 0 : index
    %c0_25 = arith.constant 0 : index
    %38 = vector.load %arg7[%c0_24, %c0_25] : memref<128x128xbf16, #tpu.memory_space<vmem>>, vector<128x128xbf16>
    %cst_26 = arith.constant dense<0.000000e+00> : vector<128x128xf32>
    %39 = tpu.matmul %37, %38, %cst_26 {dimension_numbers = #tpu.dot_dimension_numbers<[1], [0], [0], [1], [0, 0, 1, 1], [], []>} : vector<128x128xbf16>, vector<128x128xbf16>, vector<128x128xf32> -> vector<128x128xf32>
    %40 = arith.truncf %39 : vector<128x128xf32> to vector<128x128xbf16>
    %c0_27 = arith.constant 0 : index
    %c0_28 = arith.constant 0 : index
    %41 = vector.load %arg8[%c0_27, %c0_28] : memref<128x128xbf16, #tpu.memory_space<vmem>>, vector<128x128xbf16>
    %cst_29 = arith.constant dense<0.000000e+00> : vector<128x128xf32>
    %42 = tpu.matmul %40, %41, %cst_29 {dimension_numbers = #tpu.dot_dimension_numbers<[1], [0], [0], [1], [0, 0, 1, 1], [], []>} : vector<128x128xbf16>, vector<128x128xbf16>, vector<128x128xf32> -> vector<128x128xf32>
    %c0_30 = arith.constant 0 : index
    %c0_31 = arith.constant 0 : index
    %43 = vector.load %arg9[%c0_30, %c0_31] : memref<1x128xf32, #tpu.memory_space<vmem>>, vector<1x128xf32>
    %44 = vector.broadcast %43 : vector<1x128xf32> to vector<128x128xf32>
    %45 = arith.addf %42, %44 : vector<128x128xf32>
    %c0_32 = arith.constant 0 : index
    %c0_33 = arith.constant 0 : index
    %c0_34 = arith.constant 0 : index
    %c0_35 = arith.constant 0 : index
    %46 = vector.load %arg10[%c0_32, %c0_33, %c0_34, %c0_35] : memref<1x1x128x128xf32, #tpu.memory_space<vmem>>, vector<1x1x128x128xf32>
    %47 = vector.shape_cast %46 : vector<1x1x128x128xf32> to vector<128x128xf32>
    %48 = vector.shape_cast %45 : vector<128x128xf32> to vector<1x1x128x128xf32>
    tpu.vector_store %arg10[%c0_32, %c0_33, %c0_34, %c0_35], %48 {strides = array<i32>} : memref<1x1x128x128xf32, #tpu.memory_space<vmem>>, vector<1x1x128x128xf32>,
    return
  }
  func.func @transform_0(%arg0: i32, %arg1: i32) -> (i32, i32, i32) {
    %c0_i32 = arith.constant 0 : i32
    %c0_i32_0 = arith.constant 0 : i32
    %c0_i32_1 = arith.constant 0 : i32
    return %arg0, %c0_i32, %c0_i32_0 : i32, i32, i32
  }
  func.func @transform_1(%arg0: i32, %arg1: i32) -> (i32, i32, i32) {
    %c0_i32 = arith.constant 0 : i32
    %c0_i32_0 = arith.constant 0 : i32
    %c0_i32_1 = arith.constant 0 : i32
    return %arg1, %c0_i32, %c0_i32_0 : i32, i32, i32
  }
  func.func @transform_2(%arg0: i32, %arg1: i32) -> (i32, i32, i32) {
    %c0_i32 = arith.constant 0 : i32
    %c0_i32_0 = arith.constant 0 : i32
    %c0_i32_1 = arith.constant 0 : i32
    return %arg1, %c0_i32, %c0_i32_0 : i32, i32, i32
  }
  func.func @transform_3(%arg0: i32, %arg1: i32) -> (i32, i32, i32) {
    %c0_i32 = arith.constant 0 : i32
    %c0_i32_0 = arith.constant 0 : i32
    %c0_i32_1 = arith.constant 0 : i32
    return %arg1, %c0_i32, %c0_i32_0 : i32, i32, i32
  }
  func.func @transform_4(%arg0: i32, %arg1: i32) -> (i32, i32, i32) {
    %c0_i32 = arith.constant 0 : i32
    %c0_i32_0 = arith.constant 0 : i32
    %c0_i32_1 = arith.constant 0 : i32
    return %arg1, %c0_i32, %c0_i32_0 : i32, i32, i32
  }
  func.func @transform_5(%arg0: i32, %arg1: i32) -> (i32, i32) {
    %c0_i32 = arith.constant 0 : i32
    %c0_i32_0 = arith.constant 0 : i32
    %c0_i32_1 = arith.constant 0 : i32
    return %c0_i32, %c0_i32_0 : i32, i32
  }
  func.func @transform_6(%arg0: i32, %arg1: i32) -> (i32, i32) {
    %c0_i32 = arith.constant 0 : i32
    %c0_i32_0 = arith.constant 0 : i32
    %c0_i32_1 = arith.constant 0 : i32
    return %c0_i32, %c0_i32_0 : i32, i32
  }
  func.func @transform_7(%arg0: i32, %arg1: i32) -> (i32, i32) {
    %c0_i32 = arith.constant 0 : i32
    %c0_i32_0 = arith.constant 0 : i32
    %c0_i32_1 = arith.constant 0 : i32
    return %c0_i32, %c0_i32_0 : i32, i32
  }
  func.func @transform_8(%arg0: i32, %arg1: i32) -> (i32, i32, i32, i32) {
    %c0_i32 = arith.constant 0 : i32
    %c0_i32_0 = arith.constant 0 : i32
    %c0_i32_1 = arith.constant 0 : i32
    return %arg0, %arg1, %c0_i32, %c0_i32_0 : i32, i32, i32, i32
  }
  func.func @transform_9(%arg0: i32, %arg1: i32) -> (i32, i32, i32, i32) {
    %c0_i32 = arith.constant 0 : i32
    %c0_i32_0 = arith.constant 0 : i32
    %c0_i32_1 = arith.constant 0 : i32
    return %arg0, %arg1, %c0_i32, %c0_i32_0 : i32, i32, i32, i32
  }
}

</mosaic_0001>

<llo_original>
// kernel: token_merging_attention.1
$region0: #{token_merging_attention.1}
  #allocation0 [shape = 'u32[]', space=smem, size = 0x4, offset = 0x4, fixed_abs, tag = 'smem constant byte address 0x4 - core index']
  #allocation1 [shape = 'u32[144,128]{1,0:T(1,128)}', space=vmem, size = 0x12000, scoped, tag = 'internal scratch']
  %s0 = inlined_call_operand.vmem [shape: bf16[2,128,128], index: 0, kind: input, shape index: {}]
  %s1 = inlined_call_operand.vmem [shape: bf16[4,128,32], index: 1, kind: input, shape index: {}]
  %s2 = inlined_call_operand.vmem [shape: f32[4,1,32], index: 2, kind: input, shape index: {}]
  %s3 = inlined_call_operand.vmem [shape: bf16[4,128,32], index: 3, kind: input, shape index: {}]
  %s4 = inlined_call_operand.vmem [shape: f32[4,1,32], index: 4, kind: input, shape index: {}]
  %s5 = inlined_call_operand.vmem [shape: bf16[128,128], index: 5, kind: input, shape index: {}]
  %s6 = inlined_call_operand.vmem [shape: bf16[128,128], index: 6, kind: input, shape index: {}]
  %s7 = inlined_call_operand.vmem [shape: f32[1,128], index: 7, kind: input, shape index: {}]
  %s8 = inlined_call_operand.hbm [shape: f32[2,4,128,128], index: 8, kind: output, shape index: {0}]
  %s9 = inlined_call_operand.vmem [shape: s32[2,4,128,1], index: 9, kind: output, shape index: {1}]
  %10 = xla_tuple %s8, %s9
  %s11 = sld [smem:[#allocation0]]
  $region73: #{token_merging_attention.1} parent=0
    _
  %s13 = ssub.s32 1, %s11
  %s14 = scalar_select 0, %s13, %s11
  $region1: #{token_merging_attention.1} parent=0
    #allocation2 [shape = 'u8[131072]{0}', space=vmem, size = 0x20000, scoped, tag = 'output window, operand 0']
    #allocation3 [shape = 's32[2]{0}', space=sflag, size = 0x8, scoped, tag = 'scoped memory for token_merging_attention.1']
    %15 = vsyncpa [#allocation3], 0
    %s16 = scalar_lea.sflag [#allocation3], 1
    %17 = vsyncpa %s16, 0
    loop: start=0, step=1, limit=10
    $region2: #{token_merging_attention.1} parent=1 // loop_pre_header
      _
    $region3: #{token_merging_attention.1} parent=1 // loop_header
      %s19 = sphi 0, %s23
      %p20 = scmp.ge.s32.totalorder %s19, 10
      %s26 = sphi 0, %s38
      %s27 = sphi 0, %s34
      %s28 = sphi 0, %s26
      %s29 = sphi 0, %s27
      %s30 = sphi 0, %s28
      %s31 = sphi 0, %s29
      %s41 = sphi 0, %s43
      %s44 = sphi 0, %s41
      %s45 = sphi 0, %s44
      %s61 = sphi 0, %s45
      %s67 = sphi 0, %s69
      %s70 = sphi 0, %s67
      %s71 = sphi 0, %s70
      %s87 = sphi 0, %s71
      %s93 = sphi 0, %s95
      %s96 = sphi 0, %s93
      %s97 = sphi 0, %s96
      %s113 = sphi 0, %s97
      %s119 = sphi 0, %s121
      %s122 = sphi 0, %s119
      %s123 = sphi 0, %s122
      %s139 = sphi 0, %s123
      %s145 = sphi 0, %s147
      %s148 = sphi 0, %s145
      %s149 = sphi 0, %s148
      %s165 = sphi 0, %s149
      %s169 = sphi 0, %s169
      %s171 = sphi 0, %s169
      %s172 = sphi 0, %s171
      %s186 = sphi 0, %s172
      %s190 = sphi 0, %s190
      %s192 = sphi 0, %s190
      %s193 = sphi 0, %s192
      %s207 = sphi 0, %s193
      %s211 = sphi 0, %s211
      %s213 = sphi 0, %s211
      %s214 = sphi 0, %s213
      %s228 = sphi 0, %s214
      %s236 = sphi 0, %s238
      %s239 = sphi 0, %s236
      %s240 = sphi 0, %s239
      %s256 = sphi 0, %s240
      %s264 = sphi 0, %s266
      %s267 = sphi 0, %s264
      %s268 = sphi 0, %s267
      %s284 = sphi 0, %s268
    $region4: #{token_merging_attention.1} parent=1 // loop_header_branch
      %22 = sbr.rel (%p20) target = $region8
    $region5: #{token_merging_attention.1} parent=1 // loop_body
      %s24 = ssub.s32 %s19, 1
      %s25 = ssub.s32 %s19, 2
      %s32 = sadd.s32 1, %s27
      %p33 = scmp.ge.s32.totalorder %s32, 4
      %s34 = scalar_select %p33, 0, %s32
      %s35 = sadd.s32 1, %s26
      %s36 = scalar_select %p33, %s35, %s26
      %p37 = scmp.ge.s32.totalorder %s36, 2
      %s38 = scalar_select %p37, 0, %s36
      %s39 = ssub.s32 %s26, %s38
      %p40 = scmp.eq.s32.totalorder %s39, 0
      %s42 = sadd.s32 %s41, 1
      %s43 = scalar_select %p40, %s41, %s42
      %p46 = pneg %p40
      %p47 = scmp.eq.s32.totalorder %s19, 7
      %p48 = por %p46, %p47
      %p49 = scmp.ne.s32.totalorder %s41, %s44
      %p50 = scmp.eq.s32.totalorder %s19, 0
      %p51 = por %p49, %p50
      %p52 = scmp.ne.s32.totalorder %s41, %s44
      %p53 = scmp.eq.s32.totalorder %s24, 7
      %p54 = por %p52, %p53
      %p55 = scmp.ne.s32.totalorder %s44, %s45
      %p56 = scmp.eq.s32.totalorder %s24, 0
      %p57 = por %p55, %p56
      %p58 = scmp.ne.s32.totalorder %s44, %s45
      %p59 = scmp.eq.s32.totalorder %s25, 7
      %p60 = por %p58, %p59
      %p62 = scmp.ne.s32.totalorder %s45, %s61
      %p63 = scmp.eq.s32.totalorder %s25, 0
      %p64 = por %p62, %p63
      %s65 = ssub.s32 %s27, %s34
      %p66 = scmp.eq.s32.totalorder %s65, 0
      %s68 = sadd.s32 %s67, 1
      %s69 = scalar_select %p66, %s67, %s68
      %p72 = pneg %p66
      %p73 = scmp.eq.s32.totalorder %s19, 7
      %p74 = por %p72, %p73
      %p75 = scmp.ne.s32.totalorder %s67, %s70
      %p76 = scmp.eq.s32.totalorder %s19, 0
      %p77 = por %p75, %p76
      %p78 = scmp.ne.s32.totalorder %s67, %s70
      %p79 = scmp.eq.s32.totalorder %s24, 7
      %p80 = por %p78, %p79
      %p81 = scmp.ne.s32.totalorder %s70, %s71
      %p82 = scmp.eq.s32.totalorder %s24, 0
      %p83 = por %p81, %p82
      %p84 = scmp.ne.s32.totalorder %s70, %s71
      %p85 = scmp.eq.s32.totalorder %s25, 7
      %p86 = por %p84, %p85
      %p88 = scmp.ne.s32.totalorder %s71, %s87
      %p89 = scmp.eq.s32.totalorder %s25, 0
      %p90 = por %p88, %p89
      %s91 = ssub.s32 %s27, %s34
      %p92 = scmp.eq.s32.totalorder %s91, 0
      %s94 = sadd.s32 %s93, 1
      %s95 = scalar_select %p92, %s93, %s94
      %p98 = pneg %p92
      %p99 = scmp.eq.s32.totalorder %s19, 7
      %p100 = por %p98, %p99
      %p101 = scmp.ne.s32.totalorder %s93, %s96
      %p102 = scmp.eq.s32.totalorder %s19, 0
      %p103 = por %p101, %p102
      %p104 = scmp.ne.s32.totalorder %s93, %s96
      %p105 = scmp.eq.s32.totalorder %s24, 7
      %p106 = por %p104, %p105
      %p107 = scmp.ne.s32.totalorder %s96, %s97
      %p108 = scmp.eq.s32.totalorder %s24, 0
      %p109 = por %p107, %p108
      %p110 = scmp.ne.s32.totalorder %s96, %s97
      %p111 = scmp.eq.s32.totalorder %s25, 7
      %p112 = por %p110, %p111
      %p114 = scmp.ne.s32.totalorder %s97, %s113
      %p115 = scmp.eq.s32.totalorder %s25, 0
      %p116 = por %p114, %p115
      %s117 = ssub.s32 %s27, %s34
      %p118 = scmp.eq.s32.totalorder %s117, 0
      %s120 = sadd.s32 %s119, 1
      %s121 = scalar_select %p118, %s119, %s120
      %p124 = pneg %p118
      %p125 = scmp.eq.s32.totalorder %s19, 7
      %p126 = por %p124, %p125
      %p127 = scmp.ne.s32.totalorder %s119, %s122
      %p128 = scmp.eq.s32.totalorder %s19, 0
      %p129 = por %p127, %p128
      %p130 = scmp.ne.s32.totalorder %s119, %s122
      %p131 = scmp.eq.s32.totalorder %s24, 7
      %p132 = por %p130, %p131
      %p133 = scmp.ne.s32.totalorder %s122, %s123
      %p134 = scmp.eq.s32.totalorder %s24, 0
      %p135 = por %p133, %p134
      %p136 = scmp.ne.s32.totalorder %s122, %s123
      %p137 = scmp.eq.s32.totalorder %s25, 7
      %p138 = por %p136, %p137
      %p140 = scmp.ne.s32.totalorder %s123, %s139
      %p141 = scmp.eq.s32.totalorder %s25, 0
      %p142 = por %p140, %p141
      %s143 = ssub.s32 %s27, %s34
      %p144 = scmp.eq.s32.totalorder %s143, 0
      %s146 = sadd.s32 %s145, 1
      %s147 = scalar_select %p144, %s145, %s146
      %p150 = pneg %p144
      %p151 = scmp.eq.s32.totalorder %s19, 7
      %p152 = por %p150, %p151
      %p153 = scmp.ne.s32.totalorder %s145, %s148
      %p154 = scmp.eq.s32.totalorder %s19, 0
      %p155 = por %p153, %p154
      %p156 = scmp.ne.s32.totalorder %s145, %s148
      %p157 = scmp.eq.s32.totalorder %s24, 7
      %p158 = por %p156, %p157
      %p159 = scmp.ne.s32.totalorder %s148, %s149
      %p160 = scmp.eq.s32.totalorder %s24, 0
      %p161 = por %p159, %p160
      %p162 = scmp.ne.s32.totalorder %s148, %s149
      %p163 = scmp.eq.s32.totalorder %s25, 7
      %p164 = por %p162, %p163
      %p166 = scmp.ne.s32.totalorder %s149, %s165
      %p167 = scmp.eq.s32.totalorder %s25, 0
      %p168 = por %p166, %p167
      %s170 = sadd.s32 %s169, 1
      %p173 = scmp.eq.s32.totalorder %s19, 7
      %p174 = scmp.ne.s32.totalorder %s169, %s171
      %p175 = scmp.eq.s32.totalorder %s19, 0
      %p176 = por %p174, %p175
      %p177 = scmp.ne.s32.totalorder %s169, %s171
      %p178 = scmp.eq.s32.totalorder %s24, 7
      %p179 = por %p177, %p178
      %p180 = scmp.ne.s32.totalorder %s171, %s172
      %p181 = scmp.eq.s32.totalorder %s24, 0
      %p182 = por %p180, %p181
      %p183 = scmp.ne.s32.totalorder %s171, %s172
      %p184 = scmp.eq.s32.totalorder %s25, 7
      %p185 = por %p183, %p184
      %p187 = scmp.ne.s32.totalorder %s172, %s186
      %p188 = scmp.eq.s32.totalorder %s25, 0
      %p189 = por %p187, %p188
      %s191 = sadd.s32 %s190, 1
      %p194 = scmp.eq.s32.totalorder %s19, 7
      %p195 = scmp.ne.s32.totalorder %s190, %s192
      %p196 = scmp.eq.s32.totalorder %s19, 0
      %p197 = por %p195, %p196
      %p198 = scmp.ne.s32.totalorder %s190, %s192
      %p199 = scmp.eq.s32.totalorder %s24, 7
      %p200 = por %p198, %p199
      %p201 = scmp.ne.s32.totalorder %s192, %s193
      %p202 = scmp.eq.s32.totalorder %s24, 0
      %p203 = por %p201, %p202
      %p204 = scmp.ne.s32.totalorder %s192, %s193
      %p205 = scmp.eq.s32.totalorder %s25, 7
      %p206 = por %p204, %p205
      %p208 = scmp.ne.s32.totalorder %s193, %s207
      %p209 = scmp.eq.s32.totalorder %s25, 0
      %p210 = por %p208, %p209
      %s212 = sadd.s32 %s211, 1
      %p215 = scmp.eq.s32.totalorder %s19, 7
      %p216 = scmp.ne.s32.totalorder %s211, %s213
      %p217 = scmp.eq.s32.totalorder %s19, 0
      %p218 = por %p216, %p217
      %p219 = scmp.ne.s32.totalorder %s211, %s213
      %p220 = scmp.eq.s32.totalorder %s24, 7
      %p221 = por %p219, %p220
      %p222 = scmp.ne.s32.totalorder %s213, %s214
      %p223 = scmp.eq.s32.totalorder %s24, 0
      %p224 = por %p222, %p223
      %p225 = scmp.ne.s32.totalorder %s213, %s214
      %p226 = scmp.eq.s32.totalorder %s25, 7
      %p227 = por %p225, %p226
      %p229 = scmp.ne.s32.totalorder %s214, %s228
      %p230 = scmp.eq.s32.totalorder %s25, 0
      %p231 = por %p229, %p230
      %s232 = ssub.s32 %s26, %s38
      %s233 = ssub.s32 %s27, %s34
      %s234 = sor.u32 %s232, %s233
      %p235 = scmp.eq.s32.totalorder %s234, 0
      %s237 = sadd.s32 %s236, 1
      %s238 = scalar_select %p235, %s236, %s237
      %p241 = pneg %p235
      %p242 = scmp.eq.s32.totalorder %s19, 7
      %p243 = por %p241, %p242
      %p244 = scmp.ne.s32.totalorder %s236, %s239
      %p245 = scmp.eq.s32.totalorder %s19, 0
      %p246 = por %p244, %p245
      %p247 = scmp.ne.s32.totalorder %s236, %s239
      %p248 = scmp.eq.s32.totalorder %s24, 7
      %p249 = por %p247, %p248
      %p250 = scmp.ne.s32.totalorder %s239, %s240
      %p251 = scmp.eq.s32.totalorder %s24, 0
      %p252 = por %p250, %p251
      %p253 = scmp.ne.s32.totalorder %s239, %s240
      %p254 = scmp.eq.s32.totalorder %s25, 7
      %p255 = por %p253, %p254
      %p257 = scmp.ne.s32.totalorder %s240, %s256
      %p258 = scmp.eq.s32.totalorder %s25, 0
      %p259 = por %p257, %p258
      %s260 = ssub.s32 %s26, %s38
      %s261 = ssub.s32 %s27, %s34
      %s262 = sor.u32 %s260, %s261
      %p263 = scmp.eq.s32.totalorder %s262, 0
      %s265 = sadd.s32 %s264, 1
      %s266 = scalar_select %p263, %s264, %s265
      %p269 = pneg %p263
      %p270 = scmp.eq.s32.totalorder %s19, 7
      %p271 = por %p269, %p270
      %p272 = scmp.ne.s32.totalorder %s264, %s267
      %p273 = scmp.eq.s32.totalorder %s19, 0
      %p274 = por %p272, %p273
      %p275 = scmp.ne.s32.totalorder %s264, %s267
      %p276 = scmp.eq.s32.totalorder %s24, 7
      %p277 = por %p275, %p276
      %p278 = scmp.ne.s32.totalorder %s267, %s268
      %p279 = scmp.eq.s32.totalorder %s24, 0
      %p280 = por %p278, %p279
      %p281 = scmp.ne.s32.totalorder %s267, %s268
      %p282 = scmp.eq.s32.totalorder %s25, 7
      %p283 = por %p281, %p282
      %p285 = scmp.ne.s32.totalorder %s268, %s284
      %p286 = scmp.eq.s32.totalorder %s25, 0
      %p287 = por %p285, %p286
      %p288 = scmp.le.s32.totalorder 1, %s19
      %p289 = scmp.lt.s32.totalorder %s19, 9
      %p290 = pnand %p288, %p289
      %p291 = pneg %p290
      // Predicated region
      $region9: #{token_merging_attention.1} parent=5 // pred_check
        _
      $region10: #{token_merging_attention.1} parent=5 // pred_check_branch
        %293 = sbr.rel (%p290) target = $region12
      $region11: #{token_merging_attention.1} parent=5 // pred_region
        %s294 = ssub.s32 %s19, 1
        // Predicated region
        $region13: #{token_merging_attention.1} parent=11 // pred_check
          %p295 = pneg %p182
        $region14: #{token_merging_attention.1} parent=11 // pred_check_branch
          %297 = sbr.rel (%p295) target = $region16
        $region15: #{token_merging_attention.1} parent=11 // pred_region
          _
        $region16: #{token_merging_attention.1} parent=11 // pred_fallthru
          _
        // Predicated region
        $region17: #{token_merging_attention.1} parent=11 // pred_check
          %p298 = pneg %p203
        $region18: #{token_merging_attention.1} parent=11 // pred_check_branch
          %300 = sbr.rel (%p298) target = $region20
        $region19: #{token_merging_attention.1} parent=11 // pred_region
          _
        $region20: #{token_merging_attention.1} parent=11 // pred_fallthru
          _
        // Predicated region
        $region21: #{token_merging_attention.1} parent=11 // pred_check
          %p301 = pneg %p224
        $region22: #{token_merging_attention.1} parent=11 // pred_check_branch
          %303 = sbr.rel (%p301) target = $region24
        $region23: #{token_merging_attention.1} parent=11 // pred_region
          _
        $region24: #{token_merging_attention.1} parent=11 // pred_fallthru
          _
      $region12: #{token_merging_attention.1} parent=5 // pred_fallthru
        _
      %p304 = scmp.lt.s32.totalorder %s19, 8
      // Predicated region
      $region25: #{token_merging_attention.1} parent=5 // pred_check
        %p305 = pneg %p304
      $region26: #{token_merging_attention.1} parent=5 // pred_check_branch
        %307 = sbr.rel (%p305) target = $region28
      $region27: #{token_merging_attention.1} parent=5 // pred_region
        // Predicated region
        $region29: #{token_merging_attention.1} parent=27 // pred_check
          %p308 = pneg %p51
        $region30: #{token_merging_attention.1} parent=27 // pred_check_branch
          %310 = sbr.rel (%p308) target = $region32
        $region31: #{token_merging_attention.1} parent=27 // pred_region
          %p311 = scmp.lt.s32.totalorder %s26, 1
          %s312 = scalar_select %p311, %s26, 1
          %s313 = smul.addr %s312, 16
          %s314 = smul.addr %s313, 4
          %s315 = scalar_lea.vmem %s0, %s314
        $region32: #{token_merging_attention.1} parent=27 // pred_fallthru
          _
        // Predicated region
        $region33: #{token_merging_attention.1} parent=27 // pred_check
          %p316 = pneg %p77
        $region34: #{token_merging_attention.1} parent=27 // pred_check_branch
          %318 = sbr.rel (%p316) target = $region36
        $region35: #{token_merging_attention.1} parent=27 // pred_region
          %p319 = scmp.lt.s32.totalorder %s27, 3
          %s320 = scalar_select %p319, %s27, 3
          %s321 = smul.addr %s320, 16
          %s322 = smul.addr %s321, 4
          %s323 = scalar_lea.vmem %s1, %s322
        $region36: #{token_merging_attention.1} parent=27 // pred_fallthru
          _
        // Predicated region
        $region37: #{token_merging_attention.1} parent=27 // pred_check
          %p324 = pneg %p103
        $region38: #{token_merging_attention.1} parent=27 // pred_check_branch
          %326 = sbr.rel (%p324) target = $region40
        $region39: #{token_merging_attention.1} parent=27 // pred_region
          %p327 = scmp.lt.s32.totalorder %s27, 3
          %s328 = scalar_select %p327, %s27, 3
          %s329 = scalar_lea.vmem %s2, %s328
        $region40: #{token_merging_attention.1} parent=27 // pred_fallthru
          _
        // Predicated region
        $region41: #{token_merging_attention.1} parent=27 // pred_check
          %p330 = pneg %p129
        $region42: #{token_merging_attention.1} parent=27 // pred_check_branch
          %332 = sbr.rel (%p330) target = $region44
        $region43: #{token_merging_attention.1} parent=27 // pred_region
          %p333 = scmp.lt.s32.totalorder %s27, 3
          %s334 = scalar_select %p333, %s27, 3
          %s335 = smul.addr %s334, 16
          %s336 = smul.addr %s335, 4
          %s337 = scalar_lea.vmem %s3, %s336
        $region44: #{token_merging_attention.1} parent=27 // pred_fallthru
          _
        // Predicated region
        $region45: #{token_merging_attention.1} parent=27 // pred_check
          %p338 = pneg %p155
        $region46: #{token_merging_attention.1} parent=27 // pred_check_branch
          %340 = sbr.rel (%p338) target = $region48
        $region47: #{token_merging_attention.1} parent=27 // pred_region
          %p341 = scmp.lt.s32.totalorder %s27, 3
          %s342 = scalar_select %p341, %s27, 3
          %s343 = scalar_lea.vmem %s4, %s342
        $region48: #{token_merging_attention.1} parent=27 // pred_fallthru
          _
      $region28: #{token_merging_attention.1} parent=5 // pred_fallthru
        _
      %p344 = scmp.le.s32.totalorder 1, %s19
      %p345 = scmp.lt.s32.totalorder %s19, 9
      %p346 = pnand %p344, %p345
      %p347 = pneg %p346
      // Predicated region
      $region49: #{token_merging_attention.1} parent=5 // pred_check
        _
      $region50: #{token_merging_attention.1} parent=5 // pred_check_branch
        %349 = sbr.rel (%p346) target = $region52
      $region51: #{token_merging_attention.1} parent=5 // pred_region
        %s350 = ssub.s32 %s19, 1
        %p351 = scmp.lt.s32.totalorder %s28, 1
        %s352 = scalar_select %p351, %s28, 1
        %s353 = smul.addr %s352, 16
        %s354 = smul.addr %s353, 4
        %s355 = scalar_lea.vmem %s0, %s354
        %p356 = pneg %p57
        %p357 = pneg %p54
        %p358 = scmp.lt.s32.totalorder %s29, 3
        %s359 = scalar_select %p358, %s29, 3
        %s360 = smul.addr %s359, 16
        %s361 = smul.addr %s360, 4
        %s362 = scalar_lea.vmem %s1, %s361
        %p363 = pneg %p83
        %p364 = pneg %p80
        %p365 = scmp.lt.s32.totalorder %s29, 3
        %s366 = scalar_select %p365, %s29, 3
        %s367 = scalar_lea.vmem %s2, %s366
        %p368 = pneg %p109
        %p369 = pneg %p106
        %p370 = scmp.lt.s32.totalorder %s29, 3
        %s371 = scalar_select %p370, %s29, 3
        %s372 = smul.addr %s371, 16
        %s373 = smul.addr %s372, 4
        %s374 = scalar_lea.vmem %s3, %s373
        %p375 = pneg %p135
        %p376 = pneg %p132
        %p377 = scmp.lt.s32.totalorder %s29, 3
        %s378 = scalar_select %p377, %s29, 3
        %s379 = scalar_lea.vmem %s4, %s378
        %p380 = pneg %p161
        %p381 = pneg %p158
        %p382 = pneg %p182
        %p383 = pneg %p179
        %p384 = pneg %p203
        %p385 = pneg %p200
        %p386 = pneg %p224
        %p387 = pneg %p221
        %p388 = pneg %p252
        %p389 = pneg %p249
        %s390 = sand.u32 %s239, 1
        %s391 = scalar_lea.sflag [#allocation3], %s390
        %s392 = sand.u32 %s239, 1
        %s393 = smul.addr %s392, 128
        %s394 = scalar_lea.vmem [#allocation2], %s393
        %p395 = pneg %p280
        %p396 = pneg %p277
        %p397 = scmp.lt.s32.totalorder %s28, 1
        %s398 = scalar_select %p397, %s28, 1
        %p399 = scmp.lt.s32.totalorder %s29, 3
        %s400 = scalar_select %p399, %s29, 3
        %s401 = smul.addr %s400, 16
        %s402 = smul.addr %s398, 64
        %s403 = sadd.s32 %s401, %s402
        %s404 = smul.addr %s403, 8
        %s405 = scalar_lea.vmem %s9, %s404
        %p406 = scmp.lt.s32.totalorder %s28, 1
        %s407 = scalar_select %p406, %s28, 1
        %s408 = smul.addr %s407, 16
        %s409 = smul.addr %s408, 4
        %s410 = scalar_lea.vmem %s0, %s409
        %p411 = scmp.lt.s32.totalorder %s29, 3
        %s412 = scalar_select %p411, %s29, 3
        %s413 = smul.addr %s412, 16
        %s414 = smul.addr %s413, 4
        %s415 = scalar_lea.vmem %s1, %s414
        %p416 = scmp.lt.s32.totalorder %s29, 3
        %s417 = scalar_select %p416, %s29, 3
        %s418 = scalar_lea.vmem %s2, %s417
        %p419 = scmp.lt.s32.totalorder %s29, 3
        %s420 = scalar_select %p419, %s29, 3
        %s421 = smul.addr %s420, 16
        %s422 = smul.addr %s421, 4
        %s423 = scalar_lea.vmem %s3, %s422
        %p424 = scmp.lt.s32.totalorder %s29, 3
        %s425 = scalar_select %p424, %s29, 3
        %s426 = scalar_lea.vmem %s4, %s425
        %p427 = scmp.lt.s32.totalorder %s28, 1
        %s428 = scalar_select %p427, %s28, 1
        %p429 = scmp.lt.s32.totalorder %s29, 3
        %s430 = scalar_select %p429, %s29, 3
        %s431 = smul.addr %s430, 16
        %s432 = smul.addr %s428, 64
        %s433 = sadd.s32 %s431, %s432
        %s434 = smul.addr %s433, 8
        %s435 = scalar_lea.vmem %s9, %s434
        %v437 = vld [vmem:[%s410] sm:$0xf]
        %v438 = vld [vmem:[%s410 + $0x4] sm:$0xf]
        %v439 = vld [vmem:[%s410 + $0x8] sm:$0xf]
        %v440 = vld [vmem:[%s410 + $0xc] sm:$0xf]
        %v441 = vld [vmem:[%s410 + $0x10] sm:$0xf]
        %v442 = vld [vmem:[%s410 + $0x14] sm:$0xf]
        %v443 = vld [vmem:[%s410 + $0x18] sm:$0xf]
        %v444 = vld [vmem:[%s410 + $0x1c] sm:$0xf]
        %v445 = vld [vmem:[%s410 + $0x20] sm:$0xf]
        %v446 = vld [vmem:[%s410 + $0x24] sm:$0xf]
        %v447 = vld [vmem:[%s410 + $0x28] sm:$0xf]
        %v448 = vld [vmem:[%s410 + $0x2c] sm:$0xf]
        %v449 = vld [vmem:[%s410 + $0x30] sm:$0xf]
        %v450 = vld [vmem:[%s410 + $0x34] sm:$0xf]
        %v451 = vld [vmem:[%s410 + $0x38] sm:$0xf]
        %v452 = vld [vmem:[%s410 + $0x3c] sm:$0xf]
        %v453 = vld [vmem:[%s415] sm:$0xf]
        %v454 = vld [vmem:[%s415 + $0x4] sm:$0xf]
        %v455 = vld [vmem:[%s415 + $0x8] sm:$0xf]
        %v456 = vld [vmem:[%s415 + $0xc] sm:$0xf]
        %v457 = vld [vmem:[%s415 + $0x10] sm:$0xf]
        %v458 = vld [vmem:[%s415 + $0x14] sm:$0xf]
        %v459 = vld [vmem:[%s415 + $0x18] sm:$0xf]
        %v460 = vld [vmem:[%s415 + $0x1c] sm:$0xf]
        %v461 = vld [vmem:[%s415 + $0x20] sm:$0xf]
        %v462 = vld [vmem:[%s415 + $0x24] sm:$0xf]
        %v463 = vld [vmem:[%s415 + $0x28] sm:$0xf]
        %v464 = vld [vmem:[%s415 + $0x2c] sm:$0xf]
        %v465 = vld [vmem:[%s415 + $0x30] sm:$0xf]
        %v466 = vld [vmem:[%s415 + $0x34] sm:$0xf]
        %v467 = vld [vmem:[%s415 + $0x38] sm:$0xf]
        %v468 = vld [vmem:[%s415 + $0x3c] sm:$0xf]
        %v469 = vld [vmem:[%s418] sm:$0x1]
        %v471 = vlaneseq
        %v472 = vshrl.u32 %v471, 7
        %v473 = vsub.s32 0, %v472
        %v474 = vrot.slane %v469, %v473
        %v492 = vunpack.c.l.b16 %v437
        %v493 = vunpack.c.l.b16 %v438
        %v494 = vunpack.c.l.b16 %v439
        %v495 = vunpack.c.l.b16 %v440
        %v496 = vunpack.c.l.b16 %v441
        %v497 = vunpack.c.l.b16 %v442
        %v498 = vunpack.c.l.b16 %v443
        %v499 = vunpack.c.l.b16 %v444
        %v500 = vunpack.c.l.b16 %v445
        %v501 = vunpack.c.l.b16 %v446
        %v502 = vunpack.c.l.b16 %v447
        %v503 = vunpack.c.l.b16 %v448
        %v504 = vunpack.c.l.b16 %v449
        %v505 = vunpack.c.l.b16 %v450
        %v506 = vunpack.c.l.b16 %v451
        %v507 = vunpack.c.l.b16 %v452
        %v508 = vpack.c.b16 %v493, %v492
        %v509 = vpack.c.b16 %v495, %v494
        %v510 = vpack.c.b16 %v497, %v496
        %v511 = vpack.c.b16 %v499, %v498
        %v512 = vpack.c.b16 %v501, %v500
        %v513 = vpack.c.b16 %v503, %v502
        %v514 = vpack.c.b16 %v505, %v504
        %v515 = vpack.c.b16 %v507, %v506
        %v540 = vunpack.c.l.b16 %v453
        %v541 = vunpack.c.l.b16 %v454
        %v542 = vunpack.c.l.b16 %v455
        %v543 = vunpack.c.l.b16 %v456
        %v544 = vunpack.c.l.b16 %v457
        %v545 = vunpack.c.l.b16 %v458
        %v546 = vunpack.c.l.b16 %v459
        %v547 = vunpack.c.l.b16 %v460
        %v548 = vunpack.c.l.b16 %v461
        %v549 = vunpack.c.l.b16 %v462
        %v550 = vunpack.c.l.b16 %v463
        %v551 = vunpack.c.l.b16 %v464
        %v552 = vunpack.c.l.b16 %v465
        %v553 = vunpack.c.l.b16 %v466
        %v554 = vunpack.c.l.b16 %v467
        %v555 = vunpack.c.l.b16 %v468
        %v556 = vpack.c.b16 %v541, %v540
        %v557 = vpack.c.b16 %v543, %v542
        %v558 = vpack.c.b16 %v545, %v544
        %v559 = vpack.c.b16 %v547, %v546
        %v560 = vpack.c.b16 %v549, %v548
        %v561 = vpack.c.b16 %v551, %v550
        %v562 = vpack.c.b16 %v553, %v552
        %v563 = vpack.c.b16 %v555, %v554
        %572 = vmatprep.subr.bf16.mxu0 0
        %573 = vmatpush1.bf16.msra.mxu0 %v556
        %574 = vmatprep.subr.bf16.mxu0 0
        %575 = vmatpush1.bf16.msra.mxu0 %v557
        %576 = vmatprep.subr.bf16.mxu0 0
        %577 = vmatpush1.bf16.msra.mxu0 %v558
        %578 = vmatprep.subr.bf16.mxu0 0
        %579 = vmatpush1.bf16.msra.mxu0 %v559
        %580 = vmatprep.subr.bf16.mxu0 0
        %581 = vmatpush1.bf16.msra.mxu0 %v560
        %582 = vmatprep.subr.bf16.mxu0 0
        %583 = vmatpush1.bf16.msra.mxu0 %v561
        %584 = vmatprep.subr.bf16.mxu0 0
        %585 = vmatpush1.bf16.msra.mxu0 %v562
        %586 = vmatprep.subr.bf16.mxu0 0
        %587 = vmatpush1.bf16.msra.mxu0 %v563
        %588 = vmatprep.subr.bf16.mxu0 0
        %589 = vmatpush1.bf16.msra.mxu0 0
        %590 = vmatprep.subr.bf16.mxu0 0
        %591 = vmatpush1.bf16.msra.mxu0 0
        %592 = vmatprep.subr.bf16.mxu0 0
        %593 = vmatpush1.bf16.msra.mxu0 0
        %594 = vmatprep.subr.bf16.mxu0 0
        %595 = vmatpush1.bf16.msra.mxu0 0
        %596 = vmatprep.subr.bf16.mxu0 0
        %597 = vmatpush1.bf16.msra.mxu0 0
        %598 = vmatprep.subr.bf16.mxu0 0
        %599 = vmatpush1.bf16.msra.mxu0 0
        %600 = vmatprep.subr.bf16.mxu0 0
        %601 = vmatpush1.bf16.msra.mxu0 0
        %602 = vmatprep.subr.bf16.mxu0 0
        %603 = vmatpush1.bf16.msra.mxu0 0
        %604 = vmatprep.mubr.bf16.mxu0 0
        %605 = vmatmul.mubr.bf16.gmra.mrb[0].mxu0 %v508
        %v606 = vpop.f32.mrb[0].mxu0
        %v607 = vadd.f32 %v474, %v606
        %v608 = vpop.f32.mrb[0].mxu0
        %v609 = vpop.f32.mrb[0].mxu0
        %v610 = vadd.f32 %v474, %v609
        %v611 = vpop.f32.mrb[0].mxu0
        %612 = vmatprep.mubr.bf16.mxu0 0
        %613 = vmatmul.mubr.bf16.gmra.mrb[0].mxu0 %v509
        %v614 = vpop.f32.mrb[0].mxu0
        %v615 = vadd.f32 %v474, %v614
        %v616 = vpop.f32.mrb[0].mxu0
        %v617 = vpop.f32.mrb[0].mxu0
        %v618 = vadd.f32 %v474, %v617
        %v619 = vpop.f32.mrb[0].mxu0
        %620 = vmatprep.mubr.bf16.mxu0 0
        %621 = vmatmul.mubr.bf16.gmra.mrb[0].mxu0 %v510
        %v622 = vpop.f32.mrb[0].mxu0
        %v623 = vadd.f32 %v474, %v622
        %v624 = vpop.f32.mrb[0].mxu0
        %v625 = vpop.f32.mrb[0].mxu0
        %v626 = vadd.f32 %v474, %v625
        %v627 = vpop.f32.mrb[0].mxu0
        %628 = vmatprep.mubr.bf16.mxu0 0
        %629 = vmatmul.mubr.bf16.gmra.mrb[0].mxu0 %v511
        %v630 = vpop.f32.mrb[0].mxu0
        %v631 = vadd.f32 %v474, %v630
        %v632 = vpop.f32.mrb[0].mxu0
        %v633 = vpop.f32.mrb[0].mxu0
        %v634 = vadd.f32 %v474, %v633
        %v635 = vpop.f32.mrb[0].mxu0
        %636 = vmatprep.mubr.bf16.mxu0 0
        %637 = vmatmul.mubr.bf16.gmra.mrb[0].mxu0 %v512
        %v638 = vpop.f32.mrb[0].mxu0
        %v639 = vadd.f32 %v474, %v638
        %v640 = vpop.f32.mrb[0].mxu0
        %v641 = vpop.f32.mrb[0].mxu0
        %v642 = vadd.f32 %v474, %v641
        %v643 = vpop.f32.mrb[0].mxu0
        %644 = vmatprep.mubr.bf16.mxu0 0
        %645 = vmatmul.mubr.bf16.gmra.mrb[0].mxu0 %v513
        %v646 = vpop.f32.mrb[0].mxu0
        %v647 = vadd.f32 %v474, %v646
        %v648 = vpop.f32.mrb[0].mxu0
        %v649 = vpop.f32.mrb[0].mxu0
        %v650 = vadd.f32 %v474, %v649
        %v651 = vpop.f32.mrb[0].mxu0
        %652 = vmatprep.mubr.bf16.mxu0 0
        %653 = vmatmul.mubr.bf16.gmra.mrb[0].mxu0 %v514
        %v654 = vpop.f32.mrb[0].mxu0
        %v655 = vadd.f32 %v474, %v654
        %v656 = vpop.f32.mrb[0].mxu0
        %v657 = vpop.f32.mrb[0].mxu0
        %v658 = vadd.f32 %v474, %v657
        %v659 = vpop.f32.mrb[0].mxu0
        %660 = vmatprep.mubr.bf16.mxu0 0
        %661 = vmatmul.mubr.bf16.gmra.mrb[0].mxu0 %v515
        %v662 = vpop.f32.mrb[0].mxu0
        %v663 = vadd.f32 %v474, %v662
        %v664 = vpop.f32.mrb[0].mxu0
        %v665 = vpop.f32.mrb[0].mxu0
        %v666 = vadd.f32 %v474, %v665
        %v667 = vpop.f32.mrb[0].mxu0
        %668 = vdwg.mxu0
        %v669 = vld [vmem:[%s423] sm:$0xf]
        %v670 = vld [vmem:[%s423 + $0x4] sm:$0xf]
        %v671 = vld [vmem:[%s423 + $0x8] sm:$0xf]
        %v672 = vld [vmem:[%s423 + $0xc] sm:$0xf]
        %v673 = vld [vmem:[%s423 + $0x10] sm:$0xf]
        %v674 = vld [vmem:[%s423 + $0x14] sm:$0xf]
        %v675 = vld [vmem:[%s423 + $0x18] sm:$0xf]
        %v676 = vld [vmem:[%s423 + $0x1c] sm:$0xf]
        %v677 = vld [vmem:[%s423 + $0x20] sm:$0xf]
        %v678 = vld [vmem:[%s423 + $0x24] sm:$0xf]
        %v679 = vld [vmem:[%s423 + $0x28] sm:$0xf]
        %v680 = vld [vmem:[%s423 + $0x2c] sm:$0xf]
        %v681 = vld [vmem:[%s423 + $0x30] sm:$0xf]
        %v682 = vld [vmem:[%s423 + $0x34] sm:$0xf]
        %v683 = vld [vmem:[%s423 + $0x38] sm:$0xf]
        %v684 = vld [vmem:[%s423 + $0x3c] sm:$0xf]
        %v685 = vld [vmem:[%s426] sm:$0x1]
        %v687 = vlaneseq
        %v688 = vshrl.u32 %v687, 7
        %v689 = vsub.s32 0, %v688
        %v690 = vrot.slane %v685, %v689
        %v708 = vunpack.c.l.b16 %v669
        %v709 = vunpack.c.l.b16 %v670
        %v710 = vunpack.c.l.b16 %v671
        %v711 = vunpack.c.l.b16 %v672
        %v712 = vunpack.c.l.b16 %v673
        %v713 = vunpack.c.l.b16 %v674
        %v714 = vunpack.c.l.b16 %v675
        %v715 = vunpack.c.l.b16 %v676
        %v716 = vunpack.c.l.b16 %v677
        %v717 = vunpack.c.l.b16 %v678
        %v718 = vunpack.c.l.b16 %v679
        %v719 = vunpack.c.l.b16 %v680
        %v720 = vunpack.c.l.b16 %v681
        %v721 = vunpack.c.l.b16 %v682
        %v722 = vunpack.c.l.b16 %v683
        %v723 = vunpack.c.l.b16 %v684
        %v724 = vpack.c.b16 %v709, %v708
        %v725 = vpack.c.b16 %v711, %v710
        %v726 = vpack.c.b16 %v713, %v712
        %v727 = vpack.c.b16 %v715, %v714
        %v728 = vpack.c.b16 %v717, %v716
        %v729 = vpack.c.b16 %v719, %v718
        %v730 = vpack.c.b16 %v721, %v720
        %v731 = vpack.c.b16 %v723, %v722
        %740 = vmatprep.subr.bf16.mxu0 0
        %741 = vmatpush1.bf16.msra.mxu0 %v724
        %742 = vmatprep.subr.bf16.mxu0 0
        %743 = vmatpush1.bf16.msra.mxu0 %v725
        %744 = vmatprep.subr.bf16.mxu0 0
        %745 = vmatpush1.bf16.msra.mxu0 %v726
        %746 = vmatprep.subr.bf16.mxu0 0
        %747 = vmatpush1.bf16.msra.mxu0 %v727
        %748 = vmatprep.subr.bf16.mxu0 0
        %749 = vmatpush1.bf16.msra.mxu0 %v728
        %750 = vmatprep.subr.bf16.mxu0 0
        %751 = vmatpush1.bf16.msra.mxu0 %v729
        %752 = vmatprep.subr.bf16.mxu0 0
        %753 = vmatpush1.bf16.msra.mxu0 %v730
        %754 = vmatprep.subr.bf16.mxu0 0
        %755 = vmatpush1.bf16.msra.mxu0 %v731
        %756 = vmatprep.subr.bf16.mxu0 0
        %757 = vmatpush1.bf16.msra.mxu0 0
        %758 = vmatprep.subr.bf16.mxu0 0
        %759 = vmatpush1.bf16.msra.mxu0 0
        %760 = vmatprep.subr.bf16.mxu0 0
        %761 = vmatpush1.bf16.msra.mxu0 0
        %762 = vmatprep.subr.bf16.mxu0 0
        %763 = vmatpush1.bf16.msra.mxu0 0
        %764 = vmatprep.subr.bf16.mxu0 0
        %765 = vmatpush1.bf16.msra.mxu0 0
        %766 = vmatprep.subr.bf16.mxu0 0
        %767 = vmatpush1.bf16.msra.mxu0 0
        %768 = vmatprep.subr.bf16.mxu0 0
        %769 = vmatpush1.bf16.msra.mxu0 0
        %770 = vmatprep.subr.bf16.mxu0 0
        %771 = vmatpush1.bf16.msra.mxu0 0
        %772 = vmatprep.mubr.bf16.mxu0 0
        %773 = vmatmul.mubr.bf16.gmra.mrb[0].mxu0 %v508
        %v774 = vpop.f32.mrb[0].mxu0
        %v775 = vadd.f32 %v690, %v774
        %v776 = vpop.f32.mrb[0].mxu0
        %v777 = vpop.f32.mrb[0].mxu0
        %v778 = vadd.f32 %v690, %v777
        %v779 = vpop.f32.mrb[0].mxu0
        %780 = vmatprep.mubr.bf16.mxu0 0
        %781 = vmatmul.mubr.bf16.gmra.mrb[0].mxu0 %v509
        %v782 = vpop.f32.mrb[0].mxu0
        %v783 = vadd.f32 %v690, %v782
        %v784 = vpop.f32.mrb[0].mxu0
        %v785 = vpop.f32.mrb[0].mxu0
        %v786 = vadd.f32 %v690, %v785
        %v787 = vpop.f32.mrb[0].mxu0
        %788 = vmatprep.mubr.bf16.mxu0 0
        %789 = vmatmul.mubr.bf16.gmra.mrb[0].mxu0 %v510
        %v790 = vpop.f32.mrb[0].mxu0
        %v791 = vadd.f32 %v690, %v790
        %v792 = vpop.f32.mrb[0].mxu0
        %v793 = vpop.f32.mrb[0].mxu0
        %v794 = vadd.f32 %v690, %v793
        %v795 = vpop.f32.mrb[0].mxu0
        %796 = vmatprep.mubr.bf16.mxu0 0
        %797 = vmatmul.mubr.bf16.gmra.mrb[0].mxu0 %v511
        %v798 = vpop.f32.mrb[0].mxu0
        %v799 = vadd.f32 %v690, %v798
        %v800 = vpop.f32.mrb[0].mxu0
        %v801 = vpop.f32.mrb[0].mxu0
        %v802 = vadd.f32 %v690, %v801
        %v803 = vpop.f32.mrb[0].mxu0
        %804 = vmatprep.mubr.bf16.mxu0 0
        %805 = vmatmul.mubr.bf16.gmra.mrb[0].mxu0 %v512
        %v806 = vpop.f32.mrb[0].mxu0
        %v807 = vadd.f32 %v690, %v806
        %v808 = vpop.f32.mrb[0].mxu0
        %v809 = vpop.f32.mrb[0].mxu0
        %v810 = vadd.f32 %v690, %v809
        %v811 = vpop.f32.mrb[0].mxu0
        %812 = vmatprep.mubr.bf16.mxu0 0
        %813 = vmatmul.mubr.bf16.gmra.mrb[0].mxu0 %v513
        %v814 = vpop.f32.mrb[0].mxu0
        %v815 = vadd.f32 %v690, %v814
        %v816 = vpop.f32.mrb[0].mxu0
        %v817 = vpop.f32.mrb[0].mxu0
        %v818 = vadd.f32 %v690, %v817
        %v819 = vpop.f32.mrb[0].mxu0
        %820 = vmatprep.mubr.bf16.mxu0 0
        %821 = vmatmul.mubr.bf16.gmra.mrb[0].mxu0 %v514
        %v822 = vpop.f32.mrb[0].mxu0
        %v823 = vadd.f32 %v690, %v822
        %v824 = vpop.f32.mrb[0].mxu0
        %v825 = vpop.f32.mrb[0].mxu0
        %v826 = vadd.f32 %v690, %v825
        %v827 = vpop.f32.mrb[0].mxu0
        %828 = vmatprep.mubr.bf16.mxu0 0
        %829 = vmatmul.mubr.bf16.gmra.mrb[0].mxu0 %v515
        %v830 = vpop.f32.mrb[0].mxu0
        %v831 = vadd.f32 %v690, %v830
        %v832 = vpop.f32.mrb[0].mxu0
        %v833 = vpop.f32.mrb[0].mxu0
        %v834 = vadd.f32 %v690, %v833
        %v835 = vpop.f32.mrb[0].mxu0
        %836 = vdwg.mxu0
        %v837 = vpack.c.bf16 %v610, %v607
        %v838 = vpack.c.bf16 %v618, %v615
        %v839 = vpack.c.bf16 %v626, %v623
        %v840 = vpack.c.bf16 %v634, %v631
        %v841 = vpack.c.bf16 %v642, %v639
        %v842 = vpack.c.bf16 %v650, %v647
        %v843 = vpack.c.bf16 %v658, %v655
        %v844 = vpack.c.bf16 %v666, %v663
        %v845 = vpack.c.bf16 %v778, %v775
        %v846 = vpack.c.bf16 %v786, %v783
        %v847 = vpack.c.bf16 %v794, %v791
        %v848 = vpack.c.bf16 %v802, %v799
        %v849 = vpack.c.bf16 %v810, %v807
        %v850 = vpack.c.bf16 %v818, %v815
        %v851 = vpack.c.bf16 %v826, %v823
        %v852 = vpack.c.bf16 %v834, %v831
        %vm853 = vcmask 261120
        %v855 = vsel %vm853, %v837, 0
        %v858 = vsel %vm853, %v838, 0
        %v861 = vsel %vm853, %v839, 0
        %v864 = vsel %vm853, %v840, 0
        %v867 = vsel %vm853, %v841, 0
        %v870 = vsel %vm853, %v842, 0
        %v873 = vsel %vm853, %v843, 0
        %v876 = vsel %vm853, %v844, 0
        %v879 = vsel %vm853, %v845, 0
        %v882 = vsel %vm853, %v846, 0
        %v885 = vsel %vm853, %v847, 0
        %v888 = vsel %vm853, %v848, 0
        %v891 = vsel %vm853, %v849, 0
        %v894 = vsel %vm853, %v850, 0
        %v897 = vsel %vm853, %v851, 0
        %v900 = vsel %vm853, %v852, 0
        %902 = vmatprep.subr.bf16.mxu0 0
        %903 = vmatpush1.bf16.xpose.msra.mxu0 %v879
        %904 = vmatprep.subr.bf16.mxu0 0
        %905 = vmatpush1.bf16.xpose.msra.mxu0 %v882
        %906 = vmatprep.subr.bf16.mxu0 0
        %907 = vmatpush1.bf16.xpose.msra.mxu0 %v885
        %908 = vmatprep.subr.bf16.mxu0 0
        %909 = vmatpush1.bf16.xpose.msra.mxu0 %v888
        %910 = vmatprep.subr.bf16.mxu0 0
        %911 = vmatpush1.bf16.xpose.msra.mxu0 %v891
        %912 = vmatprep.subr.bf16.mxu0 0
        %913 = vmatpush1.bf16.xpose.msra.mxu0 %v894
        %914 = vmatprep.subr.bf16.mxu0 0
        %915 = vmatpush1.bf16.xpose.msra.mxu0 %v897
        %916 = vmatprep.subr.bf16.mxu0 0
        %917 = vmatpush1.bf16.xpose.msra.mxu0 %v900
        %918 = vmatprep.subr.bf16.mxu0 0
        %919 = vmatpush1.bf16.xpose.msra.mxu0 0
        %920 = vmatprep.subr.bf16.mxu0 0
        %921 = vmatpush1.bf16.xpose.msra.mxu0 0
        %922 = vmatprep.subr.bf16.mxu0 0
        %923 = vmatpush1.bf16.xpose.msra.mxu0 0
        %924 = vmatprep.subr.bf16.mxu0 0
        %925 = vmatpush1.bf16.xpose.msra.mxu0 0
        %926 = vmatprep.subr.bf16.mxu0 0
        %927 = vmatpush1.bf16.xpose.msra.mxu0 0
        %928 = vmatprep.subr.bf16.mxu0 0
        %929 = vmatpush1.bf16.xpose.msra.mxu0 0
        %930 = vmatprep.subr.bf16.mxu0 0
        %931 = vmatpush1.bf16.xpose.msra.mxu0 0
        %932 = vmatprep.subr.bf16.mxu0 0
        %933 = vmatpush1.bf16.xpose.msra.mxu0 0
        %934 = vmatprep.mubr.bf16.mxu0 0
        %935 = vmatmul.mubr.bf16.gmra.mrb[0].mxu0 %v855
        %v936 = vpop.f32.mrb[0].mxu0
        %v937 = vadd.f32 0.0, %v936
        %v938 = vpop.f32.mrb[0].mxu0
        %v939 = vpop.f32.mrb[0].mxu0
        %v940 = vadd.f32 0.0, %v939
        %v941 = vpop.f32.mrb[0].mxu0
        %942 = vmatprep.mubr.bf16.mxu0 0
        %943 = vmatmul.mubr.bf16.gmra.mrb[0].mxu0 %v858
        %v944 = vpop.f32.mrb[0].mxu0
        %v945 = vadd.f32 0.0, %v944
        %v946 = vpop.f32.mrb[0].mxu0
        %v947 = vpop.f32.mrb[0].mxu0
        %v948 = vadd.f32 0.0, %v947
        %v949 = vpop.f32.mrb[0].mxu0
        %950 = vmatprep.mubr.bf16.mxu0 0
        %951 = vmatmul.mubr.bf16.gmra.mrb[0].mxu0 %v861
        %v952 = vpop.f32.mrb[0].mxu0
        %v953 = vadd.f32 0.0, %v952
        %v954 = vpop.f32.mrb[0].mxu0
        %v955 = vpop.f32.mrb[0].mxu0
        %v956 = vadd.f32 0.0, %v955
        %v957 = vpop.f32.mrb[0].mxu0
        %958 = vmatprep.mubr.bf16.mxu0 0
        %959 = vmatmul.mubr.bf16.gmra.mrb[0].mxu0 %v864
        %v960 = vpop.f32.mrb[0].mxu0
        %v961 = vadd.f32 0.0, %v960
        %v962 = vpop.f32.mrb[0].mxu0
        %v963 = vpop.f32.mrb[0].mxu0
        %v964 = vadd.f32 0.0, %v963
        %v965 = vpop.f32.mrb[0].mxu0
        %966 = vmatprep.mubr.bf16.mxu0 0
        %967 = vmatmul.mubr.bf16.gmra.mrb[0].mxu0 %v867
        %v968 = vpop.f32.mrb[0].mxu0
        %v969 = vadd.f32 0.0, %v968
        %v970 = vpop.f32.mrb[0].mxu0
        %v971 = vpop.f32.mrb[0].mxu0
        %v972 = vadd.f32 0.0, %v971
        %v973 = vpop.f32.mrb[0].mxu0
        %974 = vmatprep.mubr.bf16.mxu0 0
        %975 = vmatmul.mubr.bf16.gmra.mrb[0].mxu0 %v870
        %v976 = vpop.f32.mrb[0].mxu0
        %v977 = vadd.f32 0.0, %v976
        %v978 = vpop.f32.mrb[0].mxu0
        %v979 = vpop.f32.mrb[0].mxu0
        %v980 = vadd.f32 0.0, %v979
        %v981 = vpop.f32.mrb[0].mxu0
        %982 = vmatprep.mubr.bf16.mxu0 0
        %983 = vmatmul.mubr.bf16.gmra.mrb[0].mxu0 %v873
        %v984 = vpop.f32.mrb[0].mxu0
        %v985 = vadd.f32 0.0, %v984
        %v986 = vpop.f32.mrb[0].mxu0
        %v987 = vpop.f32.mrb[0].mxu0
        %v988 = vadd.f32 0.0, %v987
        %v989 = vpop.f32.mrb[0].mxu0
        %990 = vmatprep.mubr.bf16.mxu0 0
        %991 = vmatmul.mubr.bf16.gmra.mrb[0].mxu0 %v876
        %v992 = vpop.f32.mrb[0].mxu0
        %v993 = vadd.f32 0.0, %v992
        %v994 = vpop.f32.mrb[0].mxu0
        %v995 = vpop.f32.mrb[0].mxu0
        %v996 = vadd.f32 0.0, %v995
        %v997 = vpop.f32.mrb[0].mxu0
        %998 = vdwg.mxu0
        %v999 = vmul.f32 %v937, 0.17677669
        %v1000 = vmul.f32 %v940, 0.17677669
        %v1001 = vmul.f32 %v945, 0.17677669
        %v1002 = vmul.f32 %v948, 0.17677669
        %v1003 = vmul.f32 %v953, 0.17677669
        %v1004 = vmul.f32 %v956, 0.17677669
        %v1005 = vmul.f32 %v961, 0.17677669
        %v1006 = vmul.f32 %v964, 0.17677669
        %v1007 = vmul.f32 %v969, 0.17677669
        %v1008 = vmul.f32 %v972, 0.17677669
        %v1009 = vmul.f32 %v977, 0.17677669
        %v1010 = vmul.f32 %v980, 0.17677669
        %v1011 = vmul.f32 %v985, 0.17677669
        %v1012 = vmul.f32 %v988, 0.17677669
        %v1013 = vmul.f32 %v993, 0.17677669
        %v1014 = vmul.f32 %v996, 0.17677669
        %1015 = vmax.xlane.f32.xlu0 %v999
        %v1016 = vpop.xlane.xlu0 %1015
        %1017 = vmax.xlane.f32.xlu0 %v1000
        %v1018 = vpop.xlane.xlu0 %1017
        %1019 = vmax.xlane.f32.xlu0 %v1001
        %v1020 = vpop.xlane.xlu0 %1019
        %1021 = vmax.xlane.f32.xlu0 %v1002
        %v1022 = vpop.xlane.xlu0 %1021
        %1023 = vmax.xlane.f32.xlu0 %v1003
        %v1024 = vpop.xlane.xlu0 %1023
        %1025 = vmax.xlane.f32.xlu0 %v1004
        %v1026 = vpop.xlane.xlu0 %1025
        %1027 = vmax.xlane.f32.xlu0 %v1005
        %v1028 = vpop.xlane.xlu0 %1027
        %1029 = vmax.xlane.f32.xlu0 %v1006
        %v1030 = vpop.xlane.xlu0 %1029
        %1031 = vmax.xlane.f32.xlu0 %v1007
        %v1032 = vpop.xlane.xlu0 %1031
        %1033 = vmax.xlane.f32.xlu0 %v1008
        %v1034 = vpop.xlane.xlu0 %1033
        %1035 = vmax.xlane.f32.xlu0 %v1009
        %v1036 = vpop.xlane.xlu0 %1035
        %1037 = vmax.xlane.f32.xlu0 %v1010
        %v1038 = vpop.xlane.xlu0 %1037
        %1039 = vmax.xlane.f32.xlu0 %v1011
        %v1040 = vpop.xlane.xlu0 %1039
        %1041 = vmax.xlane.f32.xlu0 %v1012
        %v1042 = vpop.xlane.xlu0 %1041
        %1043 = vmax.xlane.f32.xlu0 %v1013
        %v1044 = vpop.xlane.xlu0 %1043
        %1045 = vmax.xlane.f32.xlu0 %v1014
        %v1046 = vpop.xlane.xlu0 %1045
        %vm1047 = vcmp.gt.f32.partialorder %v1016, -10000.0
        %vm1048 = vcmp.gt.f32.partialorder %v1018, -10000.0
        %vm1049 = vcmp.gt.f32.partialorder %v1020, -10000.0
        %vm1050 = vcmp.gt.f32.partialorder %v1022, -10000.0
        %vm1051 = vcmp.gt.f32.partialorder %v1024, -10000.0
        %vm1052 = vcmp.gt.f32.partialorder %v1026, -10000.0
        %vm1053 = vcmp.gt.f32.partialorder %v1028, -10000.0
        %vm1054 = vcmp.gt.f32.partialorder %v1030, -10000.0
        %vm1055 = vcmp.gt.f32.partialorder %v1032, -10000.0
        %vm1056 = vcmp.gt.f32.partialorder %v1034, -10000.0
        %vm1057 = vcmp.gt.f32.partialorder %v1036, -10000.0
        %vm1058 = vcmp.gt.f32.partialorder %v1038, -10000.0
        %vm1059 = vcmp.gt.f32.partialorder %v1040, -10000.0
        %vm1060 = vcmp.gt.f32.partialorder %v1042, -10000.0
        %vm1061 = vcmp.gt.f32.partialorder %v1044, -10000.0
        %vm1062 = vcmp.gt.f32.partialorder %v1046, -10000.0
        %v1063 = vsel %vm1047, 1, 0
        %v1064 = vsel %vm1048, 1, 0
        %v1065 = vsel %vm1049, 1, 0
        %v1066 = vsel %vm1050, 1, 0
        %v1067 = vsel %vm1051, 1, 0
        %v1068 = vsel %vm1052, 1, 0
        %v1069 = vsel %vm1053, 1, 0
        %v1070 = vsel %vm1054, 1, 0
        %v1071 = vsel %vm1055, 1, 0
        %v1072 = vsel %vm1056, 1, 0
        %v1073 = vsel %vm1057, 1, 0
        %v1074 = vsel %vm1058, 1, 0
        %v1075 = vsel %vm1059, 1, 0
        %v1076 = vsel %vm1060, 1, 0
        %v1077 = vsel %vm1061, 1, 0
        %v1078 = vsel %vm1062, 1, 0
        %vm1079 = vcmask 7168
        %1080 = vst.msk [vmem:[%s435] sm:$0xff] %vm1079, %v1063
        %1081 = vst.msk [vmem:[%s435 + $0x8] sm:$0xff] %vm1079, %v1064
        %1082 = vst.msk [vmem:[%s435 + $0x10] sm:$0xff] %vm1079, %v1065
        %1083 = vst.msk [vmem:[%s435 + $0x18] sm:$0xff] %vm1079, %v1066
        %1084 = vst.msk [vmem:[%s435 + $0x20] sm:$0xff] %vm1079, %v1067
        %1085 = vst.msk [vmem:[%s435 + $0x28] sm:$0xff] %vm1079, %v1068
        %1086 = vst.msk [vmem:[%s435 + $0x30] sm:$0xff] %vm1079, %v1069
        %1087 = vst.msk [vmem:[%s435 + $0x38] sm:$0xff] %vm1079, %v1070
        %1088 = vst.msk [vmem:[%s435 + $0x40] sm:$0xff] %vm1079, %v1071
        %1089 = vst.msk [vmem:[%s435 + $0x48] sm:$0xff] %vm1079, %v1072
        %1090 = vst.msk [vmem:[%s435 + $0x50] sm:$0xff] %vm1079, %v1073
        %1091 = vst.msk [vmem:[%s435 + $0x58] sm:$0xff] %vm1079, %v1074
        %1092 = vst.msk [vmem:[%s435 + $0x60] sm:$0xff] %vm1079, %v1075
        %1093 = vst.msk [vmem:[%s435 + $0x68] sm:$0xff] %vm1079, %v1076
        %1094 = vst.msk [vmem:[%s435 + $0x70] sm:$0xff] %vm1079, %v1077
        %1095 = vst.msk [vmem:[%s435 + $0x78] sm:$0xff] %vm1079, %v1078
        %v1096 = vsub.f32 %v999, %v1016
        %v1097 = vsub.f32 %v1000, %v1018
        %v1098 = vsub.f32 %v1001, %v1020
        %v1099 = vsub.f32 %v1002, %v1022
        %v1100 = vsub.f32 %v1003, %v1024
        %v1101 = vsub.f32 %v1004, %v1026
        %v1102 = vsub.f32 %v1005, %v1028
        %v1103 = vsub.f32 %v1006, %v1030
        %v1104 = vsub.f32 %v1007, %v1032
        %v1105 = vsub.f32 %v1008, %v1034
        %v1106 = vsub.f32 %v1009, %v1036
        %v1107 = vsub.f32 %v1010, %v1038
        %v1108 = vsub.f32 %v1011, %v1040
        %v1109 = vsub.f32 %v1012, %v1042
        %v1110 = vsub.f32 %v1013, %v1044
        %v1111 = vsub.f32 %v1014, %v1046
        %v1112 = vmul.f32 %v1096, 1.442695
        %v1113 = vpow.pop %v1112
        %v1114 = vmul.f32 %v1097, 1.442695
        %v1115 = vpow.pop %v1114
        %v1116 = vmul.f32 %v1098, 1.442695
        %v1117 = vpow.pop %v1116
        %v1118 = vmul.f32 %v1099, 1.442695
        %v1119 = vpow.pop %v1118
        %v1120 = vmul.f32 %v1100, 1.442695
        %v1121 = vpow.pop %v1120
        %v1122 = vmul.f32 %v1101, 1.442695
        %v1123 = vpow.pop %v1122
        %v1124 = vmul.f32 %v1102, 1.442695
        %v1125 = vpow.pop %v1124
        %v1126 = vmul.f32 %v1103, 1.442695
        %v1127 = vpow.pop %v1126
        %v1128 = vmul.f32 %v1104, 1.442695
        %v1129 = vpow.pop %v1128
        %v1130 = vmul.f32 %v1105, 1.442695
        %v1131 = vpow.pop %v1130
        %v1132 = vmul.f32 %v1106, 1.442695
        %v1133 = vpow.pop %v1132
        %v1134 = vmul.f32 %v1107, 1.442695
        %v1135 = vpow.pop %v1134
        %v1136 = vmul.f32 %v1108, 1.442695
        %v1137 = vpow.pop %v1136
        %v1138 = vmul.f32 %v1109, 1.442695
        %v1139 = vpow.pop %v1138
        %v1140 = vmul.f32 %v1110, 1.442695
        %v1141 = vpow.pop %v1140
        %v1142 = vmul.f32 %v1111, 1.442695
        %v1143 = vpow.pop %v1142
        %1144 = vadd.xlane.f32.xlu0 %v1113
        %v1145 = vpop.xlane.xlu0 %1144
        %1146 = vadd.xlane.f32.xlu0 %v1115
        %v1147 = vpop.xlane.xlu0 %1146
        %1148 = vadd.xlane.f32.xlu0 %v1117
        %v1149 = vpop.xlane.xlu0 %1148
        %1150 = vadd.xlane.f32.xlu0 %v1119
        %v1151 = vpop.xlane.xlu0 %1150
        %1152 = vadd.xlane.f32.xlu0 %v1121
        %v1153 = vpop.xlane.xlu0 %1152
        %1154 = vadd.xlane.f32.xlu0 %v1123
        %v1155 = vpop.xlane.xlu0 %1154
        %1156 = vadd.xlane.f32.xlu0 %v1125
        %v1157 = vpop.xlane.xlu0 %1156
        %1158 = vadd.xlane.f32.xlu0 %v1127
        %v1159 = vpop.xlane.xlu0 %1158
        %1160 = vadd.xlane.f32.xlu0 %v1129
        %v1161 = vpop.xlane.xlu0 %1160
        %1162 = vadd.xlane.f32.xlu0 %v1131
        %v1163 = vpop.xlane.xlu0 %1162
        %1164 = vadd.xlane.f32.xlu0 %v1133
        %v1165 = vpop.xlane.xlu0 %1164
        %1166 = vadd.xlane.f32.xlu0 %v1135
        %v1167 = vpop.xlane.xlu0 %1166
        %1168 = vadd.xlane.f32.xlu0 %v1137
        %v1169 = vpop.xlane.xlu0 %1168
        %1170 = vadd.xlane.f32.xlu0 %v1139
        %v1171 = vpop.xlane.xlu0 %1170
        %1172 = vadd.xlane.f32.xlu0 %v1141
        %v1173 = vpop.xlane.xlu0 %1172
        %1174 = vadd.xlane.f32.xlu0 %v1143
        %v1175 = vpop.xlane.xlu0 %1174
        %v1176 = vrcp.pop %v1145
        %v1177 = vrcp.pop %v1147
        %v1178 = vrcp.pop %v1149
        %v1179 = vrcp.pop %v1151
        %v1180 = vrcp.pop %v1153
        %v1181 = vrcp.pop %v1155
        %v1182 = vrcp.pop %v1157
        %v1183 = vrcp.pop %v1159
        %v1184 = vrcp.pop %v1161
        %v1185 = vrcp.pop %v1163
        %v1186 = vrcp.pop %v1165
        %v1187 = vrcp.pop %v1167
        %v1188 = vrcp.pop %v1169
        %v1189 = vrcp.pop %v1171
        %v1190 = vrcp.pop %v1173
        %v1191 = vrcp.pop %v1175
        %v1192 = vmul.f32 %v1113, %v1176
        %v1193 = vmul.f32 %v1115, %v1177
        %v1194 = vmul.f32 %v1117, %v1178
        %v1195 = vmul.f32 %v1119, %v1179
        %v1196 = vmul.f32 %v1121, %v1180
        %v1197 = vmul.f32 %v1123, %v1181
        %v1198 = vmul.f32 %v1125, %v1182
        %v1199 = vmul.f32 %v1127, %v1183
        %v1200 = vmul.f32 %v1129, %v1184
        %v1201 = vmul.f32 %v1131, %v1185
        %v1202 = vmul.f32 %v1133, %v1186
        %v1203 = vmul.f32 %v1135, %v1187
        %v1204 = vmul.f32 %v1137, %v1188
        %v1205 = vmul.f32 %v1139, %v1189
        %v1206 = vmul.f32 %v1141, %v1190
        %v1207 = vmul.f32 %v1143, %v1191
        %v1208 = vpack.c.bf16 %v1193, %v1192
        %v1209 = vpack.c.bf16 %v1195, %v1194
        %v1210 = vpack.c.bf16 %v1197, %v1196
        %v1211 = vpack.c.bf16 %v1199, %v1198
        %v1212 = vpack.c.bf16 %v1201, %v1200
        %v1213 = vpack.c.bf16 %v1203, %v1202
        %v1214 = vpack.c.bf16 %v1205, %v1204
        %v1215 = vpack.c.bf16 %v1207, %v1206
        %v1216 = vld [vmem:[%s5] sm:$0xf]
        %v1217 = vld [vmem:[%s5 + $0x4] sm:$0xf]
        %v1218 = vld [vmem:[%s5 + $0x8] sm:$0xf]
        %v1219 = vld [vmem:[%s5 + $0xc] sm:$0xf]
        %v1220 = vld [vmem:[%s5 + $0x10] sm:$0xf]
        %v1221 = vld [vmem:[%s5 + $0x14] sm:$0xf]
        %v1222 = vld [vmem:[%s5 + $0x18] sm:$0xf]
        %v1223 = vld [vmem:[%s5 + $0x1c] sm:$0xf]
        %v1224 = vld [vmem:[%s5 + $0x20] sm:$0xf]
        %v1225 = vld [vmem:[%s5 + $0x24] sm:$0xf]
        %v1226 = vld [vmem:[%s5 + $0x28] sm:$0xf]
        %v1227 = vld [vmem:[%s5 + $0x2c] sm:$0xf]
        %v1228 = vld [vmem:[%s5 + $0x30] sm:$0xf]
        %v1229 = vld [vmem:[%s5 + $0x34] sm:$0xf]
        %v1230 = vld [vmem:[%s5 + $0x38] sm:$0xf]
        %v1231 = vld [vmem:[%s5 + $0x3c] sm:$0xf]
        %v1248 = vunpack.c.l.b16 %v1216
        %v1249 = vunpack.c.l.b16 %v1217
        %v1250 = vunpack.c.l.b16 %v1218
        %v1251 = vunpack.c.l.b16 %v1219
        %v1252 = vunpack.c.l.b16 %v1220
        %v1253 = vunpack.c.l.b16 %v1221
        %v1254 = vunpack.c.l.b16 %v1222
        %v1255 = vunpack.c.l.b16 %v1223
        %v1256 = vunpack.c.l.b16 %v1224
        %v1257 = vunpack.c.l.b16 %v1225
        %v1258 = vunpack.c.l.b16 %v1226
        %v1259 = vunpack.c.l.b16 %v1227
        %v1260 = vunpack.c.l.b16 %v1228
        %v1261 = vunpack.c.l.b16 %v1229
        %v1262 = vunpack.c.l.b16 %v1230
        %v1263 = vunpack.c.l.b16 %v1231
        %v1264 = vpack.c.b16 %v1249, %v1248
        %v1265 = vpack.c.b16 %v1251, %v1250
        %v1266 = vpack.c.b16 %v1253, %v1252
        %v1267 = vpack.c.b16 %v1255, %v1254
        %v1268 = vpack.c.b16 %v1257, %v1256
        %v1269 = vpack.c.b16 %v1259, %v1258
        %v1270 = vpack.c.b16 %v1261, %v1260
        %v1271 = vpack.c.b16 %v1263, %v1262
        %1280 = vmatprep.subr.bf16.mxu0 0
        %1281 = vmatpush1.bf16.msra.mxu0 %v1264
        %1282 = vmatprep.subr.bf16.mxu0 0
        %1283 = vmatpush1.bf16.msra.mxu0 %v1265
        %1284 = vmatprep.subr.bf16.mxu0 0
        %1285 = vmatpush1.bf16.msra.mxu0 %v1266
        %1286 = vmatprep.subr.bf16.mxu0 0
        %1287 = vmatpush1.bf16.msra.mxu0 %v1267
        %1288 = vmatprep.subr.bf16.mxu0 0
        %1289 = vmatpush1.bf16.msra.mxu0 %v1268
        %1290 = vmatprep.subr.bf16.mxu0 0
        %1291 = vmatpush1.bf16.msra.mxu0 %v1269
        %1292 = vmatprep.subr.bf16.mxu0 0
        %1293 = vmatpush1.bf16.msra.mxu0 %v1270
        %1294 = vmatprep.subr.bf16.mxu0 0
        %1295 = vmatpush1.bf16.msra.mxu0 %v1271
        %1296 = vmatprep.subr.bf16.mxu0 0
        %1297 = vmatpush1.bf16.msra.mxu0 0
        %1298 = vmatprep.subr.bf16.mxu0 0
        %1299 = vmatpush1.bf16.msra.mxu0 0
        %1300 = vmatprep.subr.bf16.mxu0 0
        %1301 = vmatpush1.bf16.msra.mxu0 0
        %1302 = vmatprep.subr.bf16.mxu0 0
        %1303 = vmatpush1.bf16.msra.mxu0 0
        %1304 = vmatprep.subr.bf16.mxu0 0
        %1305 = vmatpush1.bf16.msra.mxu0 0
        %1306 = vmatprep.subr.bf16.mxu0 0
        %1307 = vmatpush1.bf16.msra.mxu0 0
        %1308 = vmatprep.subr.bf16.mxu0 0
        %1309 = vmatpush1.bf16.msra.mxu0 0
        %1310 = vmatprep.subr.bf16.mxu0 0
        %1311 = vmatpush1.bf16.msra.mxu0 0
        %1312 = vmatprep.mubr.bf16.mxu0 0
        %1313 = vmatmul.mubr.bf16.gmra.mrb[0].mxu0 %v1208
        %v1314 = vpop.f32.mrb[0].mxu0
        %v1315 = vadd.f32 0.0, %v1314
        %v1316 = vpop.f32.mrb[0].mxu0
        %v1317 = vpop.f32.mrb[0].mxu0
        %v1318 = vadd.f32 0.0, %v1317
        %v1319 = vpop.f32.mrb[0].mxu0
        %1320 = vmatprep.mubr.bf16.mxu0 0
        %1321 = vmatmul.mubr.bf16.gmra.mrb[0].mxu0 %v1209
        %v1322 = vpop.f32.mrb[0].mxu0
        %v1323 = vadd.f32 0.0, %v1322
        %v1324 = vpop.f32.mrb[0].mxu0
        %v1325 = vpop.f32.mrb[0].mxu0
        %v1326 = vadd.f32 0.0, %v1325
        %v1327 = vpop.f32.mrb[0].mxu0
        %1328 = vmatprep.mubr.bf16.mxu0 0
        %1329 = vmatmul.mubr.bf16.gmra.mrb[0].mxu0 %v1210
        %v1330 = vpop.f32.mrb[0].mxu0
        %v1331 = vadd.f32 0.0, %v1330
        %v1332 = vpop.f32.mrb[0].mxu0
        %v1333 = vpop.f32.mrb[0].mxu0
        %v1334 = vadd.f32 0.0, %v1333
        %v1335 = vpop.f32.mrb[0].mxu0
        %1336 = vmatprep.mubr.bf16.mxu0 0
        %1337 = vmatmul.mubr.bf16.gmra.mrb[0].mxu0 %v1211
        %v1338 = vpop.f32.mrb[0].mxu0
        %v1339 = vadd.f32 0.0, %v1338
        %v1340 = vpop.f32.mrb[0].mxu0
        %v1341 = vpop.f32.mrb[0].mxu0
        %v1342 = vadd.f32 0.0, %v1341
        %v1343 = vpop.f32.mrb[0].mxu0
        %1344 = vmatprep.mubr.bf16.mxu0 0
        %1345 = vmatmul.mubr.bf16.gmra.mrb[0].mxu0 %v1212
        %v1346 = vpop.f32.mrb[0].mxu0
        %v1347 = vadd.f32 0.0, %v1346
        %v1348 = vpop.f32.mrb[0].mxu0
        %v1349 = vpop.f32.mrb[0].mxu0
        %v1350 = vadd.f32 0.0, %v1349
        %v1351 = vpop.f32.mrb[0].mxu0
        %1352 = vmatprep.mubr.bf16.mxu0 0
        %1353 = vmatmul.mubr.bf16.gmra.mrb[0].mxu0 %v1213
        %v1354 = vpop.f32.mrb[0].mxu0
        %v1355 = vadd.f32 0.0, %v1354
        %v1356 = vpop.f32.mrb[0].mxu0
        %v1357 = vpop.f32.mrb[0].mxu0
        %v1358 = vadd.f32 0.0, %v1357
        %v1359 = vpop.f32.mrb[0].mxu0
        %1360 = vmatprep.mubr.bf16.mxu0 0
        %1361 = vmatmul.mubr.bf16.gmra.mrb[0].mxu0 %v1214
        %v1362 = vpop.f32.mrb[0].mxu0
        %v1363 = vadd.f32 0.0, %v1362
        %v1364 = vpop.f32.mrb[0].mxu0
        %v1365 = vpop.f32.mrb[0].mxu0
        %v1366 = vadd.f32 0.0, %v1365
        %v1367 = vpop.f32.mrb[0].mxu0
        %1368 = vmatprep.mubr.bf16.mxu0 0
        %1369 = vmatmul.mubr.bf16.gmra.mrb[0].mxu0 %v1215
        %v1370 = vpop.f32.mrb[0].mxu0
        %v1371 = vadd.f32 0.0, %v1370
        %v1372 = vpop.f32.mrb[0].mxu0
        %v1373 = vpop.f32.mrb[0].mxu0
        %v1374 = vadd.f32 0.0, %v1373
        %v1375 = vpop.f32.mrb[0].mxu0
        %1376 = vdwg.mxu0
        %v1377 = vpack.c.bf16 %v1318, %v1315
        %v1378 = vpack.c.bf16 %v1326, %v1323
        %v1379 = vpack.c.bf16 %v1334, %v1331
        %v1380 = vpack.c.bf16 %v1342, %v1339
        %v1381 = vpack.c.bf16 %v1350, %v1347
        %v1382 = vpack.c.bf16 %v1358, %v1355
        %v1383 = vpack.c.bf16 %v1366, %v1363
        %v1384 = vpack.c.bf16 %v1374, %v1371
        %v1385 = vld [vmem:[%s6] sm:$0xf]
        %v1386 = vld [vmem:[%s6 + $0x4] sm:$0xf]
        %v1387 = vld [vmem:[%s6 + $0x8] sm:$0xf]
        %v1388 = vld [vmem:[%s6 + $0xc] sm:$0xf]
        %v1389 = vld [vmem:[%s6 + $0x10] sm:$0xf]
        %v1390 = vld [vmem:[%s6 + $0x14] sm:$0xf]
        %v1391 = vld [vmem:[%s6 + $0x18] sm:$0xf]
        %v1392 = vld [vmem:[%s6 + $0x1c] sm:$0xf]
        %v1393 = vld [vmem:[%s6 + $0x20] sm:$0xf]
        %v1394 = vld [vmem:[%s6 + $0x24] sm:$0xf]
        %v1395 = vld [vmem:[%s6 + $0x28] sm:$0xf]
        %v1396 = vld [vmem:[%s6 + $0x2c] sm:$0xf]
        %v1397 = vld [vmem:[%s6 + $0x30] sm:$0xf]
        %v1398 = vld [vmem:[%s6 + $0x34] sm:$0xf]
        %v1399 = vld [vmem:[%s6 + $0x38] sm:$0xf]
        %v1400 = vld [vmem:[%s6 + $0x3c] sm:$0xf]
        %v1401 = vld [vmem:[%s7] sm:$0x1]
        %v1403 = vlaneseq
        %v1404 = vshrl.u32 %v1403, 7
        %v1405 = vsub.s32 0, %v1404
        %v1406 = vrot.slane %v1401, %v1405
        %v1424 = vunpack.c.l.b16 %v1385
        %v1425 = vunpack.c.l.b16 %v1386
        %v1426 = vunpack.c.l.b16 %v1387
        %v1427 = vunpack.c.l.b16 %v1388
        %v1428 = vunpack.c.l.b16 %v1389
        %v1429 = vunpack.c.l.b16 %v1390
        %v1430 = vunpack.c.l.b16 %v1391
        %v1431 = vunpack.c.l.b16 %v1392
        %v1432 = vunpack.c.l.b16 %v1393
        %v1433 = vunpack.c.l.b16 %v1394
        %v1434 = vunpack.c.l.b16 %v1395
        %v1435 = vunpack.c.l.b16 %v1396
        %v1436 = vunpack.c.l.b16 %v1397
        %v1437 = vunpack.c.l.b16 %v1398
        %v1438 = vunpack.c.l.b16 %v1399
        %v1439 = vunpack.c.l.b16 %v1400
        %v1440 = vpack.c.b16 %v1425, %v1424
        %v1441 = vpack.c.b16 %v1427, %v1426
        %v1442 = vpack.c.b16 %v1429, %v1428
        %v1443 = vpack.c.b16 %v1431, %v1430
        %v1444 = vpack.c.b16 %v1433, %v1432
        %v1445 = vpack.c.b16 %v1435, %v1434
        %v1446 = vpack.c.b16 %v1437, %v1436
        %v1447 = vpack.c.b16 %v1439, %v1438
        %1456 = vmatprep.subr.bf16.mxu0 0
        %1457 = vmatpush1.bf16.msra.mxu0 %v1440
        %1458 = vmatprep.subr.bf16.mxu0 0
        %1459 = vmatpush1.bf16.msra.mxu0 %v1441
        %1460 = vmatprep.subr.bf16.mxu0 0
        %1461 = vmatpush1.bf16.msra.mxu0 %v1442
        %1462 = vmatprep.subr.bf16.mxu0 0
        %1463 = vmatpush1.bf16.msra.mxu0 %v1443
        %1464 = vmatprep.subr.bf16.mxu0 0
        %1465 = vmatpush1.bf16.msra.mxu0 %v1444
        %1466 = vmatprep.subr.bf16.mxu0 0
        %1467 = vmatpush1.bf16.msra.mxu0 %v1445
        %1468 = vmatprep.subr.bf16.mxu0 0
        %1469 = vmatpush1.bf16.msra.mxu0 %v1446
        %1470 = vmatprep.subr.bf16.mxu0 0
        %1471 = vmatpush1.bf16.msra.mxu0 %v1447
        %1472 = vmatprep.subr.bf16.mxu0 0
        %1473 = vmatpush1.bf16.msra.mxu0 0
        %1474 = vmatprep.subr.bf16.mxu0 0
        %1475 = vmatpush1.bf16.msra.mxu0 0
        %1476 = vmatprep.subr.bf16.mxu0 0
        %1477 = vmatpush1.bf16.msra.mxu0 0
        %1478 = vmatprep.subr.bf16.mxu0 0
        %1479 = vmatpush1.bf16.msra.mxu0 0
        %1480 = vmatprep.subr.bf16.mxu0 0
        %1481 = vmatpush1.bf16.msra.mxu0 0
        %1482 = vmatprep.subr.bf16.mxu0 0
        %1483 = vmatpush1.bf16.msra.mxu0 0
        %1484 = vmatprep.subr.bf16.mxu0 0
        %1485 = vmatpush1.bf16.msra.mxu0 0
        %1486 = vmatprep.subr.bf16.mxu0 0
        %1487 = vmatpush1.bf16.msra.mxu0 0
        %1488 = vmatprep.mubr.bf16.mxu0 0
        %1489 = vmatmul.mubr.bf16.gmra.mrb[0].mxu0 %v1377
        %v1490 = vpop.f32.mrb[0].mxu0
        %v1491 = vadd.f32 %v1406, %v1490
        %v1492 = vpop.f32.mrb[0].mxu0
        %v1493 = vpop.f32.mrb[0].mxu0
        %v1494 = vadd.f32 %v1406, %v1493
        %v1495 = vpop.f32.mrb[0].mxu0
        %1496 = vmatprep.mubr.bf16.mxu0 0
        %1497 = vmatmul.mubr.bf16.gmra.mrb[0].mxu0 %v1378
        %v1498 = vpop.f32.mrb[0].mxu0
        %v1499 = vadd.f32 %v1406, %v1498
        %v1500 = vpop.f32.mrb[0].mxu0
        %v1501 = vpop.f32.mrb[0].mxu0
        %v1502 = vadd.f32 %v1406, %v1501
        %v1503 = vpop.f32.mrb[0].mxu0
        %1504 = vmatprep.mubr.bf16.mxu0 0
        %1505 = vmatmul.mubr.bf16.gmra.mrb[0].mxu0 %v1379
        %v1506 = vpop.f32.mrb[0].mxu0
        %v1507 = vadd.f32 %v1406, %v1506
        %v1508 = vpop.f32.mrb[0].mxu0
        %v1509 = vpop.f32.mrb[0].mxu0
        %v1510 = vadd.f32 %v1406, %v1509
        %v1511 = vpop.f32.mrb[0].mxu0
        %1512 = vmatprep.mubr.bf16.mxu0 0
        %1513 = vmatmul.mubr.bf16.gmra.mrb[0].mxu0 %v1380
        %v1514 = vpop.f32.mrb[0].mxu0
        %v1515 = vadd.f32 %v1406, %v1514
        %v1516 = vpop.f32.mrb[0].mxu0
        %v1517 = vpop.f32.mrb[0].mxu0
        %v1518 = vadd.f32 %v1406, %v1517
        %v1519 = vpop.f32.mrb[0].mxu0
        %1520 = vmatprep.mubr.bf16.mxu0 0
        %1521 = vmatmul.mubr.bf16.gmra.mrb[0].mxu0 %v1381
        %v1522 = vpop.f32.mrb[0].mxu0
        %v1523 = vadd.f32 %v1406, %v1522
        %v1524 = vpop.f32.mrb[0].mxu0
        %v1525 = vpop.f32.mrb[0].mxu0
        %v1526 = vadd.f32 %v1406, %v1525
        %v1527 = vpop.f32.mrb[0].mxu0
        %1528 = vmatprep.mubr.bf16.mxu0 0
        %1529 = vmatmul.mubr.bf16.gmra.mrb[0].mxu0 %v1382
        %v1530 = vpop.f32.mrb[0].mxu0
        %v1531 = vadd.f32 %v1406, %v1530
        %v1532 = vpop.f32.mrb[0].mxu0
        %v1533 = vpop.f32.mrb[0].mxu0
        %v1534 = vadd.f32 %v1406, %v1533
        %v1535 = vpop.f32.mrb[0].mxu0
        %1536 = vmatprep.mubr.bf16.mxu0 0
        %1537 = vmatmul.mubr.bf16.gmra.mrb[0].mxu0 %v1383
        %v1538 = vpop.f32.mrb[0].mxu0
        %v1539 = vadd.f32 %v1406, %v1538
        %v1540 = vpop.f32.mrb[0].mxu0
        %v1541 = vpop.f32.mrb[0].mxu0
        %v1542 = vadd.f32 %v1406, %v1541
        %v1543 = vpop.f32.mrb[0].mxu0
        %1544 = vmatprep.mubr.bf16.mxu0 0
        %1545 = vmatmul.mubr.bf16.gmra.mrb[0].mxu0 %v1384
        %v1546 = vpop.f32.mrb[0].mxu0
        %v1547 = vadd.f32 %v1406, %v1546
        %v1548 = vpop.f32.mrb[0].mxu0
        %v1549 = vpop.f32.mrb[0].mxu0
        %v1550 = vadd.f32 %v1406, %v1549
        %v1551 = vpop.f32.mrb[0].mxu0
        %1552 = vdwg.mxu0
        %1553 = vst [vmem:[%s394] sm:$0xff] %v1491
        %1554 = vst [vmem:[%s394 + $0x8] sm:$0xff] %v1494
        %1555 = vst [vmem:[%s394 + $0x10] sm:$0xff] %v1499
        %1556 = vst [vmem:[%s394 + $0x18] sm:$0xff] %v1502
        %1557 = vst [vmem:[%s394 + $0x20] sm:$0xff] %v1507
        %1558 = vst [vmem:[%s394 + $0x28] sm:$0xff] %v1510
        %1559 = vst [vmem:[%s394 + $0x30] sm:$0xff] %v1515
        %1560 = vst [vmem:[%s394 + $0x38] sm:$0xff] %v1518
        %1561 = vst [vmem:[%s394 + $0x40] sm:$0xff] %v1523
        %1562 = vst [vmem:[%s394 + $0x48] sm:$0xff] %v1526
        %1563 = vst [vmem:[%s394 + $0x50] sm:$0xff] %v1531
        %1564 = vst [vmem:[%s394 + $0x58] sm:$0xff] %v1534
        %1565 = vst [vmem:[%s394 + $0x60] sm:$0xff] %v1539
        %1566 = vst [vmem:[%s394 + $0x68] sm:$0xff] %v1542
        %1567 = vst [vmem:[%s394 + $0x70] sm:$0xff] %v1547
        %1568 = vst [vmem:[%s394 + $0x78] sm:$0xff] %v1550
        %s1569 = sand.u32 %s239, 1
        %s1570 = scalar_lea.sflag [#allocation3], %s1569
        %s1571 = sand.u32 %s239, 1
        %s1572 = smul.addr %s1571, 128
        %s1573 = scalar_lea.vmem [#allocation2], %s1572
        %p1574 = scmp.lt.s32.totalorder %s28, 1
        %s1575 = scalar_select %p1574, %s28, 1
        %p1576 = scmp.lt.s32.totalorder %s29, 3
        %s1577 = scalar_select %p1576, %s29, 3
        %s1578 = smul.addr %s1577, 16
        %s1579 = smul.addr %s1575, 64
        %s1580 = sadd.s32 %s1578, %s1579
        %s1581 = smul.addr %s1580, 8
        %s1582 = scalar_lea.vmem %s9, %s1581
        // Predicated region
        $region53: #{token_merging_attention.1} parent=51 // pred_check
          %p1583 = pneg %p249
        $region54: #{token_merging_attention.1} parent=51 // pred_check_branch
          %1585 = sbr.rel (%p1583) target = $region56
        $region55: #{token_merging_attention.1} parent=51 // pred_region
          %s1587 = ssub.s32 2048, 2048
          %1588 = vsyncadd %s1570, %s1587
          %s1589 = smul.addr %s29, 16
          %s1590 = smul.addr %s28, 64
          %s1591 = sadd.s32 %s1589, %s1590
          %s1592 = smul.addr %s1591, 128
          %s1593 = scalar_lea.hbm %s8, %s1592
          %s1594 = sshll.u32 %s1573, 4
          %s1595 = int_to_ptr.vmem [resolvable:$true] %s1594
          %1600 = dma.vmem_to_hbm [thread:$0]  %s1595, 2048, %s1593, %s1570, 128, 128, 8
        $region56: #{token_merging_attention.1} parent=51 // pred_fallthru
          _
        // Predicated region
        $region57: #{token_merging_attention.1} parent=51 // pred_check
          %p1601 = pneg %p277
        $region58: #{token_merging_attention.1} parent=51 // pred_check_branch
          %1603 = sbr.rel (%p1601) target = $region60
        $region59: #{token_merging_attention.1} parent=51 // pred_region
          _
        $region60: #{token_merging_attention.1} parent=51 // pred_fallthru
          _
      $region52: #{token_merging_attention.1} parent=5 // pred_fallthru
        _
      %p1604 = scmp.le.s32.totalorder 2, %s19
      // Predicated region
      $region61: #{token_merging_attention.1} parent=5 // pred_check
        %p1605 = pneg %p1604
      $region62: #{token_merging_attention.1} parent=5 // pred_check_branch
        %1607 = sbr.rel (%p1605) target = $region64
      $region63: #{token_merging_attention.1} parent=5 // pred_region
        %s1608 = ssub.s32 %s19, 2
        // Predicated region
        $region65: #{token_merging_attention.1} parent=63 // pred_check
          %p1609 = pneg %p255
        $region66: #{token_merging_attention.1} parent=63 // pred_check_branch
          %1611 = sbr.rel (%p1609) target = $region68
        $region67: #{token_merging_attention.1} parent=63 // pred_region
          %s1612 = sand.u32 %s240, 1
          %s1613 = scalar_lea.sflag [#allocation3], %s1612
          %s1614 = sand.u32 %s240, 1
          %s1615 = smul.addr %s1614, 128
          %s1616 = scalar_lea.vmem [#allocation2], %s1615
          %1617 = dma.done %s1613, 2048
        $region68: #{token_merging_attention.1} parent=63 // pred_fallthru
          _
        // Predicated region
        $region69: #{token_merging_attention.1} parent=63 // pred_check
          %p1618 = pneg %p283
        $region70: #{token_merging_attention.1} parent=63 // pred_check_branch
          %1620 = sbr.rel (%p1618) target = $region72
        $region71: #{token_merging_attention.1} parent=63 // pred_region
          %p1621 = scmp.lt.s32.totalorder %s30, 1
          %s1622 = scalar_select %p1621, %s30, 1
          %p1623 = scmp.lt.s32.totalorder %s31, 3
          %s1624 = scalar_select %p1623, %s31, 3
          %s1625 = smul.addr %s1624, 16
          %s1626 = smul.addr %s1622, 64
          %s1627 = sadd.s32 %s1625, %s1626
          %s1628 = smul.addr %s1627, 8
          %s1629 = scalar_lea.vmem %s9, %s1628
        $region72: #{token_merging_attention.1} parent=63 // pred_fallthru
          _
      $region64: #{token_merging_attention.1} parent=5 // pred_fallthru
        _
    $region6: #{token_merging_attention.1} parent=1 // loop_footer
      %s23 = sadd.s32 1, %s19
    $region7: #{token_merging_attention.1} parent=1 // loop_footer_branch
      %18 = sbr.rel target = $region3
    $region8: #{token_merging_attention.1} parent=1 // loop_exit
      _
    %1630 = vsyncpa [#allocation3], 1
    %s1631 = scalar_lea.sflag [#allocation3], 1
    %1632 = vsyncpa %s1631, 1

</llo_original>
